<compile_context>
chip_gen: v7x
topology: tpu7x:2x2x1
jax: 0.10.0
libtpu: 0.0.40
codegen_flags: <defaults>
</compile_context>

<pallas_src>
import functools

import jax
import jax.numpy as jnp
from jax.experimental import pallas as pl
from jax.experimental.pallas import tpu as pltpu


# ----------------------------------------------------------------------------
# VMEM budgeting (review: derive limits from the actual chip, not a constant).
# ----------------------------------------------------------------------------
def _tpu_vmem_capacity_bytes():
    try:
        return int(pltpu.get_tpu_info().vmem_capacity_bytes)
    except Exception:
        return 64 * 1024 * 1024          # conservative fallback (v7x per-core VMEM)


_VMEM_CAP = _tpu_vmem_capacity_bytes()
_VMEM_LIMIT = int(min(_VMEM_CAP * 0.5, 96 * 1024 * 1024))
_BLOCK_BUDGET = _VMEM_CAP // 8           # per-step (in + out + scratch) working-set target


def _largest_divisor_leq(n, cap):
    cap = int(max(1, min(n, cap)))
    for d in range(cap, 0, -1):
        if n % d == 0:
            return d
    return 1


def _pick_block_rows(total_rows, lane_width, bytes_per_row_elem):
    # largest divisor of total_rows (preferring multiples of 8) whose double-buffered
    # in+out block stays within the per-step VMEM budget
    cap = max(8, _BLOCK_BUDGET // max(1, lane_width * bytes_per_row_elem * 2))
    cap = min(total_rows, cap)
    best = None
    for d in range(int(cap), 0, -1):
        if total_rows % d == 0:
            if d == total_rows or d % 8 == 0:
                return d
            if best is None:
                best = d
    return best if best is not None else total_rows


# ----------------------------------------------------------------------------
# Host-side weight transform: HWIO (KH, KW, Cin, Cout) -> block-banded
# (KH, W*Cin, W*Cout) bf16, so the (dx, ci) contraction (with SAME zero padding
# in W folded in) is a single lane-dim matmul per dy.
# ----------------------------------------------------------------------------
def _banded_weight(w_hwio, W):
    KH, KW, Cin, Cout = w_hwio.shape
    pw = (KW - 1) // 2
    xi = jnp.arange(W)[:, None]
    xo = jnp.arange(W)[None, :]
    dx = xi - xo + pw                                            # (W, W)
    valid = (dx >= 0) & (dx < KW)
    wb = w_hwio[:, jnp.clip(dx, 0, KW - 1), :, :]                # (KH, xi, xo, Cin, Cout)
    wb = jnp.where(valid[None, :, :, None, None], wb, 0.0)
    wb = jnp.transpose(wb, (0, 1, 3, 2, 4))                      # (KH, xi, ci, xo, co)
    return wb.reshape(KH, W * Cin, W * Cout).astype(jnp.bfloat16)


# ----------------------------------------------------------------------------
# Kernel 1: [optional BN+ReLU prologue] -> 3x3 "SAME" conv (+bias)
#           -> per-chunk (sum, sum^2) batch-norm partial statistics.
# Processes NB images per grid step.  The conv is KH bf16 MXU matmuls
# (NB*H, W*Cin) x (W*Cin, W*Cout) accumulated in f32.
# ----------------------------------------------------------------------------
def _conv_bn_stats_kernel(*refs, NB, H, W, Cin, Cout, KH, ph, prologue):
    if prologue:
        scale_ref, shift_ref, x_ref, wb_ref, b_ref, y_ref, stats_ref, xp_ref = refs
    else:
        x_ref, wb_ref, b_ref, y_ref, stats_ref, xp_ref = refs
        scale_ref = shift_ref = None

    WCin, WCout = W * Cin, W * Cout
    Hp = H + 2 * ph

    # --- prologue: BN affine + ReLU of the previous block (f32 math) ---
    x = x_ref[...]                                               # (NB, H, W*Cin)
    if prologue:
        x = jnp.maximum(x.astype(jnp.float32) * scale_ref[...] + shift_ref[...], 0.0)

    # --- H-padded lane-dense bf16 scratch.  Only the halo rows are zeroed each
    #     step (interior fully overwritten) -> correct under 'parallel' grids. ---
    if ph > 0:
        halo = jnp.zeros((NB, ph, WCin), jnp.bfloat16)
        xp_ref[:, 0:ph, :] = halo
        xp_ref[:, ph + H:Hp, :] = halo
    xp_ref[:, ph:ph + H, :] = x.astype(jnp.bfloat16)

    # --- conv = KH lane-dense MXU matmuls against the block-banded weight ---
    acc = None
    for dy in range(KH):
        slab = xp_ref[:, dy:dy + H, :].reshape(NB * H, WCin)     # bf16, sublane shift only
        part = jnp.dot(slab, wb_ref[dy], preferred_element_type=jnp.float32)
        acc = part if acc is None else acc + part                # (NB*H, W*Cout) f32

    # --- per-chunk BN partial stats of the bias-free conv output (full-lane
    #     sublane reductions; per-channel reduction over W happens on the host) ---
    stats_ref[0, 0:1, :] = jnp.sum(acc, axis=0, keepdims=True)
    stats_ref[0, 1:2, :] = jnp.sum(acc * acc, axis=0, keepdims=True)

    # --- bias + lane-dense store ---
    acc = acc + b_ref[...]
    y_ref[...] = acc.reshape(NB, H, WCout).astype(y_ref.dtype)


def conv_bn_stats(x_flat, wb, bias, scale_flat=None, shift_flat=None, *,
                  H, W, Cin, Cout, KH, out_dtype):
    """x_flat: (N, H, W*Cin).  Returns
         y_flat : (N, H, W*Cout) out_dtype — conv(prologue(x)) + bias
         stats  : (num_chunks, 2, W*Cout) f32 — partial (sum, sum^2) of bias-free conv out."""
    N = x_flat.shape[0]
    ph = (KH - 1) // 2
    Hp = H + 2 * ph
    WCin, WCout = W * Cin, W * Cout
    prologue = scale_flat is not None

    in_b = jnp.dtype(x_flat.dtype).itemsize
    out_b = jnp.dtype(out_dtype).itemsize
    per_image = H * WCin * in_b + H * WCout * out_b + Hp * WCin * 2
    NB = _largest_divisor_leq(N, max(1, _BLOCK_BUDGET // max(1, per_image)))
    num_chunks = N // NB

    kernel = functools.partial(_conv_bn_stats_kernel, NB=NB, H=H, W=W, Cin=Cin,
                               Cout=Cout, KH=KH, ph=ph, prologue=prologue)

    in_specs, args = [], []
    if prologue:
        in_specs += [pl.BlockSpec((1, WCin), lambda n: (0, 0)),
                     pl.BlockSpec((1, WCin), lambda n: (0, 0))]
        args += [scale_flat, shift_flat]
    in_specs += [pl.BlockSpec((NB, H, WCin), lambda n: (n, 0, 0)),
                 pl.BlockSpec((KH, WCin, WCout), lambda n: (0, 0, 0)),
                 pl.BlockSpec((1, WCout), lambda n: (0, 0))]
    b_lanes = jnp.tile(bias.astype(jnp.float32), W).reshape(1, WCout)
    args += [x_flat, wb, b_lanes]

    flops = 2 * N * H * KH * WCin * WCout            # actual MXU work (banded formulation)
    bytes_accessed = (N * H * WCin * in_b + KH * WCin * WCout * 2
                      + N * H * WCout * out_b + num_chunks * 2 * WCout * 4)

    y, stats = pl.pallas_call(
        kernel,
        out_shape=(jax.ShapeDtypeStruct((N, H, WCout), out_dtype),
                   jax.ShapeDtypeStruct((num_chunks, 2, WCout), jnp.float32)),
        grid=(num_chunks,),
        in_specs=in_specs,
        out_specs=(pl.BlockSpec((NB, H, WCout), lambda n: (n, 0, 0)),
                   pl.BlockSpec((1, 2, WCout), lambda n: (n, 0, 0))),
        scratch_shapes=[pltpu.VMEM((NB, Hp, WCin), jnp.bfloat16)],
        compiler_params=pltpu.CompilerParams(
            dimension_semantics=("parallel",),        # no resident accumulator -> megacore OK
            vmem_limit_bytes=_VMEM_LIMIT),
        cost_estimate=pl.CostEstimate(flops=flops, transcendentals=0,
                                      bytes_accessed=bytes_accessed),
    )(*args)
    return y, stats


# ----------------------------------------------------------------------------
# Kernel 2: final fused affine batch-norm + ReLU on large lane-dense row blocks.
# ----------------------------------------------------------------------------
def _bn_relu_kernel(y_ref, scale_ref, shift_ref, o_ref):
    y = y_ref[...].astype(jnp.float32)
    o_ref[...] = jnp.maximum(y * scale_ref[...] + shift_ref[...], 0.0).astype(o_ref.dtype)


def bn_relu_flat(y_flat2d, scale_flat, shift_flat):
    R, WC = y_flat2d.shape
    blk = _pick_block_rows(R, WC, jnp.dtype(y_flat2d.dtype).itemsize + 4)
    return pl.pallas_call(
        _bn_relu_kernel,
        out_shape=jax.ShapeDtypeStruct((R, WC), jnp.float32),
        grid=(R // blk,),
        in_specs=[pl.BlockSpec((blk, WC), lambda i: (i, 0)),
                  pl.BlockSpec((1, WC), lambda i: (0, 0)),
                  pl.BlockSpec((1, WC), lambda i: (0, 0))],
        out_specs=pl.BlockSpec((blk, WC), lambda i: (i, 0)),
        compiler_params=pltpu.CompilerParams(
            dimension_semantics=("parallel",),
            vmem_limit_bytes=_VMEM_LIMIT),
        cost_estimate=pl.CostEstimate(flops=2 * R * WC, transcendentals=0,
                                      bytes_accessed=R * WC * 8 + 2 * WC * 4),
    )(y_flat2d, scale_flat, shift_flat)


# ----------------------------------------------------------------------------
# Host-side glue: fold partial stats into per-channel BN scale/shift.
# ----------------------------------------------------------------------------
def _bn_scale_shift(stats_chunks, bias, gamma, beta, count, eps=1e-5):
    nc, _, WC = stats_chunks.shape
    Cout = gamma.shape[0]
    s = stats_chunks.reshape(nc, 2, WC // Cout, Cout).sum(axis=(0, 2))   # (2, Cout)
    mean_u = s[0] / count
    var = s[1] / count - mean_u * mean_u        # biased variance (PyTorch train-mode norm)
    mean = mean_u + bias                        # bias folded here (variance is shift-invariant)
    scale = gamma * jax.lax.rsqrt(var + eps)
    shift = beta - mean * scale
    return scale, shift


def _tile_lanes(v, W):
    # per-channel (C,) -> lane-dense (1, W*C) matching the (h, w*C + c) flat layout
    return jnp.tile(v.astype(jnp.float32), W).reshape(1, -1)


# ----------------------------------------------------------------------------
# Full module forward (NCHW in / NCHW out, matching the PyTorch module).
# ----------------------------------------------------------------------------
def upsample_conv_forward(x_nchw, params, eps=1e-5):
    N, Cin, H, W = x_nchw.shape
    KH, KW, _, C1 = params["w1"].shape
    _, _, _, C2 = params["w2"].shape
    assert KH % 2 == 1 and KW % 2 == 1, "SAME padding here assumes odd kernel sizes"

    # TODO(synk): entry/exit NCHW<->NHWC relayouts remain wrapper XLA ops.
    x = jnp.transpose(x_nchw, (0, 2, 3, 1)).reshape(N, H, W * Cin)

    wb1 = _banded_weight(params["w1"], W)
    wb2 = _banded_weight(params["w2"], W)

    # conv1 (+bias) with fused partial batch stats; bf16 intermediate activation
    y1, st1 = conv_bn_stats(x, wb1, params["b1"],
                            H=H, W=W, Cin=Cin, Cout=C1, KH=KH, out_dtype=jnp.bfloat16)
    s1, t1 = _bn_scale_shift(st1, params["b1"], params["g1"], params["be1"], N * H * W, eps)

    # BN1 + ReLU fused into conv2's prologue; conv2 (+bias) with fused partial stats
    y2, st2 = conv_bn_stats(y1, wb2, params["b2"], _tile_lanes(s1, W), _tile_lanes(t1, W),
                            H=H, W=W, Cin=C1, Cout=C2, KH=KH, out_dtype=jnp.float32)
    s2, t2 = _bn_scale_shift(st2, params["b2"], params["g2"], params["be2"], N * H * W, eps)

    # final BN2 + ReLU on (N*H, W*C2) lane-dense blocks
    out = bn_relu_flat(y2.reshape(N * H, W * C2), _tile_lanes(s2, W), _tile_lanes(t2, W))

    return jnp.transpose(out.reshape(N, H, W, C2), (0, 3, 1, 2))


# Pure-JAX reference (same semantics) used only for a correctness assertion.
def _ref_forward(x_nchw, params, eps=1e-5):
    def conv(x, w, b):
        y = jax.lax.conv_general_dilated(
            x, w, (1, 1), "SAME", dimension_numbers=("NHWC", "HWIO", "NHWC"))
        return y + b

    def bn_relu(y, g, be):
        mean = jnp.mean(y, axis=(0, 1, 2))
        var = jnp.mean((y - mean) ** 2, axis=(0, 1, 2))
        return jnp.maximum((y - mean) / jnp.sqrt(var + eps) * g + be, 0.0)

    x = jnp.transpose(x_nchw, (0, 2, 3, 1))
    y = bn_relu(conv(x, params["w1"], params["b1"]), params["g1"], params["be1"])
    y = bn_relu(conv(y, params["w2"], params["b2"]), params["g2"], params["be2"])
    return jnp.transpose(y, (0, 3, 1, 2))


if __name__ == "__main__":
    key = jax.random.PRNGKey(0)
    N, C_IN, C_OUT, H, W, K = 2, 4, 8, 16, 16, 3

    ks = jax.random.split(key, 9)
    params = {
        # HWIO conv weights (PyTorch stores OIHW; equivalent after transpose)
        "w1": 0.1 * jax.random.normal(ks[0], (K, K, C_IN, C_OUT), jnp.float32),
        "b1": 0.1 * jax.random.normal(ks[1], (C_OUT,), jnp.float32),
        "g1": 1.0 + 0.1 * jax.random.normal(ks[2], (C_OUT,), jnp.float32),
        "be1": 0.1 * jax.random.normal(ks[3], (C_OUT,), jnp.float32),
        "w2": 0.1 * jax.random.normal(ks[4], (K, K, C_OUT, C_OUT), jnp.float32),
        "b2": 0.1 * jax.random.normal(ks[5], (C_OUT,), jnp.float32),
        "g2": 1.0 + 0.1 * jax.random.normal(ks[6], (C_OUT,), jnp.float32),
        "be2": 0.1 * jax.random.normal(ks[7], (C_OUT,), jnp.float32),
    }
    x = jax.random.normal(ks[8], (N, C_IN, H, W), jnp.float32)

    fwd = jax.jit(upsample_conv_forward)
    out = jax.block_until_ready(fwd(x, params))
    ref = jax.block_until_ready(_ref_forward(x, params))

    assert out.shape == (N, C_OUT, H, W), out.shape
    # bf16 MXU operands + bf16 intermediate (f32 accumulation) vs f32 reference conv.
    max_err = float(jnp.max(jnp.abs(out - ref)))
    assert jnp.allclose(out, ref, rtol=5e-2, atol=5e-2), max_err
    print("KERNEL_OK")
</pallas_src>

<mosaic_0001>
module attributes {stable_mosaic.version = 11 : i64} {
  func.func @_conv_bn_stats_kernel(%arg0: i32, %arg1: memref<2x16x64xf32, #tpu.memory_space<vmem>>, %arg2: memref<3x64x128xbf16, #tpu.memory_space<vmem>>, %arg3: memref<1x128xf32, #tpu.memory_space<vmem>>, %arg4: memref<2x16x128xbf16, #tpu.memory_space<vmem>>, %arg5: memref<1x2x128xf32, #tpu.memory_space<vmem>>, %arg6: memref<2x18x64xbf16, #tpu.memory_space<vmem>>) attributes {dimension_semantics = [#tpu.dimension_semantics<parallel>], iteration_bounds = array<i64: 1>, scalar_prefetch = 0 : i64, scratch_operands = 1 : i64, tpu.core_type = #tpu.core_type<tc>, window_params = [{transform_indices = @transform_0, window_bounds = array<i64: 2, 16, 64>}, {pipeline_mode = #tpu.pipeline_mode<synchronous>, transform_indices = @transform_1, window_bounds = array<i64: 3, 64, 128>}, {pipeline_mode = #tpu.pipeline_mode<synchronous>, transform_indices = @transform_2, window_bounds = array<i64: 1, 128>}, {transform_indices = @transform_3, window_bounds = array<i64: 2, 16, 128>}, {transform_indices = @transform_4, window_bounds = array<i64: 1, 2, 128>}]} {
    %c0 = arith.constant 0 : index
    %c0_0 = arith.constant 0 : index
    %c0_1 = arith.constant 0 : index
    %0 = vector.load %arg1[%c0, %c0_0, %c0_1] : memref<2x16x64xf32, #tpu.memory_space<vmem>>, vector<2x16x64xf32>
    %cst = arith.constant 0.000000e+00 : bf16
    %1 = vector.broadcast %cst : bf16 to vector<2x1x64xbf16>
    %c0_2 = arith.constant 0 : index
    %c0_3 = arith.constant 0 : index
    %c0_4 = arith.constant 0 : index
    %2 = vector.load %arg6[%c0_2, %c0_3, %c0_4] : memref<2x18x64xbf16, #tpu.memory_space<vmem>>, vector<2x1x64xbf16>
    tpu.vector_store %arg6[%c0_2, %c0_3, %c0_4], %1 {strides = array<i32>} : memref<2x18x64xbf16, #tpu.memory_space<vmem>>, vector<2x1x64xbf16>,
    %c0_5 = arith.constant 0 : index
    %c17 = arith.constant 17 : index
    %c0_6 = arith.constant 0 : index
    %3 = vector.load %arg6[%c0_5, %c17, %c0_6] : memref<2x18x64xbf16, #tpu.memory_space<vmem>>, vector<2x1x64xbf16>
    tpu.vector_store %arg6[%c0_5, %c17, %c0_6], %1 {strides = array<i32>} : memref<2x18x64xbf16, #tpu.memory_space<vmem>>, vector<2x1x64xbf16>,
    %4 = arith.truncf %0 : vector<2x16x64xf32> to vector<2x16x64xbf16>
    %c0_7 = arith.constant 0 : index
    %c1 = arith.constant 1 : index
    %c0_8 = arith.constant 0 : index
    %5 = vector.load %arg6[%c0_7, %c1, %c0_8] : memref<2x18x64xbf16, #tpu.memory_space<vmem>>, vector<2x16x64xbf16>
    tpu.vector_store %arg6[%c0_7, %c1, %c0_8], %4 {strides = array<i32>} : memref<2x18x64xbf16, #tpu.memory_space<vmem>>, vector<2x16x64xbf16>,
    %c0_9 = arith.constant 0 : index
    %c0_10 = arith.constant 0 : index
    %c0_11 = arith.constant 0 : index
    %6 = vector.load %arg6[%c0_9, %c0_10, %c0_11] : memref<2x18x64xbf16, #tpu.memory_space<vmem>>, vector<2x16x64xbf16>
    %7 = vector.shape_cast %6 : vector<2x16x64xbf16> to vector<32x64xbf16>
    %c0_12 = arith.constant 0 : index
    %c0_13 = arith.constant 0 : index
    %c0_14 = arith.constant 0 : index
    %8 = vector.load %arg2[%c0_12, %c0_13, %c0_14] : memref<3x64x128xbf16, #tpu.memory_space<vmem>>, vector<1x64x128xbf16>
    %9 = vector.shape_cast %8 : vector<1x64x128xbf16> to vector<64x128xbf16>
    %cst_15 = arith.constant dense<0.000000e+00> : vector<32x128xf32>
    %10 = tpu.matmul %7, %9, %cst_15 {dimension_numbers = #tpu.dot_dimension_numbers<[1], [0], [0], [1], [0, 0, 1, 1], [], []>} : vector<32x64xbf16>, vector<64x128xbf16>, vector<32x128xf32> -> vector<32x128xf32>
    %c0_16 = arith.constant 0 : index
    %c1_17 = arith.constant 1 : index
    %c0_18 = arith.constant 0 : index
    %11 = vector.load %arg6[%c0_16, %c1_17, %c0_18] : memref<2x18x64xbf16, #tpu.memory_space<vmem>>, vector<2x16x64xbf16>
    %12 = vector.shape_cast %11 : vector<2x16x64xbf16> to vector<32x64xbf16>
    %c1_19 = arith.constant 1 : index
    %c0_20 = arith.constant 0 : index
    %c0_21 = arith.constant 0 : index
    %13 = vector.load %arg2[%c1_19, %c0_20, %c0_21] : memref<3x64x128xbf16, #tpu.memory_space<vmem>>, vector<1x64x128xbf16>
    %14 = vector.shape_cast %13 : vector<1x64x128xbf16> to vector<64x128xbf16>
    %cst_22 = arith.constant dense<0.000000e+00> : vector<32x128xf32>
    %15 = tpu.matmul %12, %14, %cst_22 {dimension_numbers = #tpu.dot_dimension_numbers<[1], [0], [0], [1], [0, 0, 1, 1], [], []>} : vector<32x64xbf16>, vector<64x128xbf16>, vector<32x128xf32> -> vector<32x128xf32>
    %16 = arith.addf %10, %15 : vector<32x128xf32>
    %c0_23 = arith.constant 0 : index
    %c2 = arith.constant 2 : index
    %c0_24 = arith.constant 0 : index
    %17 = vector.load %arg6[%c0_23, %c2, %c0_24] : memref<2x18x64xbf16, #tpu.memory_space<vmem>>, vector<2x16x64xbf16>
    %18 = vector.shape_cast %17 : vector<2x16x64xbf16> to vector<32x64xbf16>
    %c2_25 = arith.constant 2 : index
    %c0_26 = arith.constant 0 : index
    %c0_27 = arith.constant 0 : index
    %19 = vector.load %arg2[%c2_25, %c0_26, %c0_27] : memref<3x64x128xbf16, #tpu.memory_space<vmem>>, vector<1x64x128xbf16>
    %20 = vector.shape_cast %19 : vector<1x64x128xbf16> to vector<64x128xbf16>
    %cst_28 = arith.constant dense<0.000000e+00> : vector<32x128xf32>
    %21 = tpu.matmul %18, %20, %cst_28 {dimension_numbers = #tpu.dot_dimension_numbers<[1], [0], [0], [1], [0, 0, 1, 1], [], []>} : vector<32x64xbf16>, vector<64x128xbf16>, vector<32x128xf32> -> vector<32x128xf32>
    %22 = arith.addf %16, %21 : vector<32x128xf32>
    %cst_29 = arith.constant dense<0.000000e+00> : vector<128xf32>
    %23 = vector.multi_reduction <add>, %22, %cst_29 [0] : vector<32x128xf32> to vector<128xf32>
    %24 = vector.shape_cast %23 : vector<128xf32> to vector<1x128xf32>
    %c0_30 = arith.constant 0 : index
    %c0_31 = arith.constant 0 : index
    %c0_32 = arith.constant 0 : index
    %25 = vector.load %arg5[%c0_30, %c0_31, %c0_32] : memref<1x2x128xf32, #tpu.memory_space<vmem>>, vector<1x1x128xf32>
    %26 = vector.shape_cast %25 : vector<1x1x128xf32> to vector<1x128xf32>
    %27 = vector.shape_cast %24 : vector<1x128xf32> to vector<1x1x128xf32>
    tpu.vector_store %arg5[%c0_30, %c0_31, %c0_32], %27 {strides = array<i32>} : memref<1x2x128xf32, #tpu.memory_space<vmem>>, vector<1x1x128xf32>,
    %28 = arith.mulf %22, %22 : vector<32x128xf32>
    %cst_33 = arith.constant dense<0.000000e+00> : vector<128xf32>
    %29 = vector.multi_reduction <add>, %28, %cst_33 [0] : vector<32x128xf32> to vector<128xf32>
    %30 = vector.shape_cast %29 : vector<128xf32> to vector<1x128xf32>
    %c0_34 = arith.constant 0 : index
    %c1_35 = arith.constant 1 : index
    %c0_36 = arith.constant 0 : index
    %31 = vector.load %arg5[%c0_34, %c1_35, %c0_36] : memref<1x2x128xf32, #tpu.memory_space<vmem>>, vector<1x1x128xf32>
    %32 = vector.shape_cast %31 : vector<1x1x128xf32> to vector<1x128xf32>
    %33 = vector.shape_cast %30 : vector<1x128xf32> to vector<1x1x128xf32>
    tpu.vector_store %arg5[%c0_34, %c1_35, %c0_36], %33 {strides = array<i32>} : memref<1x2x128xf32, #tpu.memory_space<vmem>>, vector<1x1x128xf32>,
    %c0_37 = arith.constant 0 : index
    %c0_38 = arith.constant 0 : index
    %34 = vector.load %arg3[%c0_37, %c0_38] : memref<1x128xf32, #tpu.memory_space<vmem>>, vector<1x128xf32>
    %35 = vector.broadcast %34 : vector<1x128xf32> to vector<32x128xf32>
    %36 = arith.addf %22, %35 : vector<32x128xf32>
    %37 = vector.shape_cast %36 : vector<32x128xf32> to vector<2x16x128xf32>
    %38 = arith.truncf %37 : vector<2x16x128xf32> to vector<2x16x128xbf16>
    %c0_39 = arith.constant 0 : index
    %c0_40 = arith.constant 0 : index
    %c0_41 = arith.constant 0 : index
    %39 = vector.load %arg4[%c0_39, %c0_40, %c0_41] : memref<2x16x128xbf16, #tpu.memory_space<vmem>>, vector<2x16x128xbf16>
    tpu.vector_store %arg4[%c0_39, %c0_40, %c0_41], %38 {strides = array<i32>} : memref<2x16x128xbf16, #tpu.memory_space<vmem>>, vector<2x16x128xbf16>,
    return
  }
  func.func @transform_0(%arg0: i32) -> (i32, i32, i32) {
    %c0_i32 = arith.constant 0 : i32
    %c0_i32_0 = arith.constant 0 : i32
    %c0_i32_1 = arith.constant 0 : i32
    return %arg0, %c0_i32, %c0_i32_0 : i32, i32, i32
  }
  func.func @transform_1(%arg0: i32) -> (i32, i32, i32) {
    %c0_i32 = arith.constant 0 : i32
    %c0_i32_0 = arith.constant 0 : i32
    %c0_i32_1 = arith.constant 0 : i32
    %c0_i32_2 = arith.constant 0 : i32
    return %c0_i32, %c0_i32_0, %c0_i32_1 : i32, i32, i32
  }
  func.func @transform_2(%arg0: i32) -> (i32, i32) {
    %c0_i32 = arith.constant 0 : i32
    %c0_i32_0 = arith.constant 0 : i32
    %c0_i32_1 = arith.constant 0 : i32
    return %c0_i32, %c0_i32_0 : i32, i32
  }
  func.func @transform_3(%arg0: i32) -> (i32, i32, i32) {
    %c0_i32 = arith.constant 0 : i32
    %c0_i32_0 = arith.constant 0 : i32
    %c0_i32_1 = arith.constant 0 : i32
    return %arg0, %c0_i32, %c0_i32_0 : i32, i32, i32
  }
  func.func @transform_4(%arg0: i32) -> (i32, i32, i32) {
    %c0_i32 = arith.constant 0 : i32
    %c0_i32_0 = arith.constant 0 : i32
    %c0_i32_1 = arith.constant 0 : i32
    return %arg0, %c0_i32, %c0_i32_0 : i32, i32, i32
  }
}

module attributes {stable_mosaic.version = 11 : i64} {
  func.func @_conv_bn_stats_kernel(%arg0: i32, %arg1: memref<1x128xf32, #tpu.memory_space<vmem>>, %arg2: memref<1x128xf32, #tpu.memory_space<vmem>>, %arg3: memref<2x16x128xbf16, #tpu.memory_space<vmem>>, %arg4: memref<3x128x128xbf16, #tpu.memory_space<vmem>>, %arg5: memref<1x128xf32, #tpu.memory_space<vmem>>, %arg6: memref<2x16x128xf32, #tpu.memory_space<vmem>>, %arg7: memref<1x2x128xf32, #tpu.memory_space<vmem>>, %arg8: memref<2x18x128xbf16, #tpu.memory_space<vmem>>) attributes {dimension_semantics = [#tpu.dimension_semantics<parallel>], iteration_bounds = array<i64: 1>, scalar_prefetch = 0 : i64, scratch_operands = 1 : i64, tpu.core_type = #tpu.core_type<tc>, window_params = [{pipeline_mode = #tpu.pipeline_mode<synchronous>, transform_indices = @transform_0, window_bounds = array<i64: 1, 128>}, {pipeline_mode = #tpu.pipeline_mode<synchronous>, transform_indices = @transform_1, window_bounds = array<i64: 1, 128>}, {transform_indices = @transform_2, window_bounds = array<i64: 2, 16, 128>}, {pipeline_mode = #tpu.pipeline_mode<synchronous>, transform_indices = @transform_3, window_bounds = array<i64: 3, 128, 128>}, {pipeline_mode = #tpu.pipeline_mode<synchronous>, transform_indices = @transform_4, window_bounds = array<i64: 1, 128>}, {transform_indices = @transform_5, window_bounds = array<i64: 2, 16, 128>}, {transform_indices = @transform_6, window_bounds = array<i64: 1, 2, 128>}]} {
    %c0 = arith.constant 0 : index
    %c0_0 = arith.constant 0 : index
    %c0_1 = arith.constant 0 : index
    %0 = vector.load %arg3[%c0, %c0_0, %c0_1] : memref<2x16x128xbf16, #tpu.memory_space<vmem>>, vector<2x16x128xbf16>
    %1 = arith.extf %0 : vector<2x16x128xbf16> to vector<2x16x128xf32>
    %c0_2 = arith.constant 0 : index
    %c0_3 = arith.constant 0 : index
    %2 = vector.load %arg1[%c0_2, %c0_3] : memref<1x128xf32, #tpu.memory_space<vmem>>, vector<1x128xf32>
    %3 = vector.shape_cast %2 : vector<1x128xf32> to vector<1x1x128xf32>
    %4 = vector.broadcast %3 : vector<1x1x128xf32> to vector<2x16x128xf32>
    %5 = arith.mulf %1, %4 : vector<2x16x128xf32>
    %c0_4 = arith.constant 0 : index
    %c0_5 = arith.constant 0 : index
    %6 = vector.load %arg2[%c0_4, %c0_5] : memref<1x128xf32, #tpu.memory_space<vmem>>, vector<1x128xf32>
    %7 = vector.shape_cast %6 : vector<1x128xf32> to vector<1x1x128xf32>
    %8 = vector.broadcast %7 : vector<1x1x128xf32> to vector<2x16x128xf32>
    %9 = arith.addf %5, %8 : vector<2x16x128xf32>
    %cst = arith.constant 0.000000e+00 : f32
    %10 = vector.broadcast %cst : f32 to vector<2x16x128xf32>
    %11 = arith.maximumf %9, %10 : vector<2x16x128xf32>
    %cst_6 = arith.constant 0.000000e+00 : bf16
    %12 = vector.broadcast %cst_6 : bf16 to vector<2x1x128xbf16>
    %c0_7 = arith.constant 0 : index
    %c0_8 = arith.constant 0 : index
    %c0_9 = arith.constant 0 : index
    %13 = vector.load %arg8[%c0_7, %c0_8, %c0_9] : memref<2x18x128xbf16, #tpu.memory_space<vmem>>, vector<2x1x128xbf16>
    tpu.vector_store %arg8[%c0_7, %c0_8, %c0_9], %12 {strides = array<i32>} : memref<2x18x128xbf16, #tpu.memory_space<vmem>>, vector<2x1x128xbf16>,
    %c0_10 = arith.constant 0 : index
    %c17 = arith.constant 17 : index
    %c0_11 = arith.constant 0 : index
    %14 = vector.load %arg8[%c0_10, %c17, %c0_11] : memref<2x18x128xbf16, #tpu.memory_space<vmem>>, vector<2x1x128xbf16>
    tpu.vector_store %arg8[%c0_10, %c17, %c0_11], %12 {strides = array<i32>} : memref<2x18x128xbf16, #tpu.memory_space<vmem>>, vector<2x1x128xbf16>,
    %15 = arith.truncf %11 : vector<2x16x128xf32> to vector<2x16x128xbf16>
    %c0_12 = arith.constant 0 : index
    %c1 = arith.constant 1 : index
    %c0_13 = arith.constant 0 : index
    %16 = vector.load %arg8[%c0_12, %c1, %c0_13] : memref<2x18x128xbf16, #tpu.memory_space<vmem>>, vector<2x16x128xbf16>
    tpu.vector_store %arg8[%c0_12, %c1, %c0_13], %15 {strides = array<i32>} : memref<2x18x128xbf16, #tpu.memory_space<vmem>>, vector<2x16x128xbf16>,
    %c0_14 = arith.constant 0 : index
    %c0_15 = arith.constant 0 : index
    %c0_16 = arith.constant 0 : index
    %17 = vector.load %arg8[%c0_14, %c0_15, %c0_16] : memref<2x18x128xbf16, #tpu.memory_space<vmem>>, vector<2x16x128xbf16>
    %18 = vector.shape_cast %17 : vector<2x16x128xbf16> to vector<32x128xbf16>
    %c0_17 = arith.constant 0 : index
    %c0_18 = arith.constant 0 : index
    %c0_19 = arith.constant 0 : index
    %19 = vector.load %arg4[%c0_17, %c0_18, %c0_19] : memref<3x128x128xbf16, #tpu.memory_space<vmem>>, vector<1x128x128xbf16>
    %20 = vector.shape_cast %19 : vector<1x128x128xbf16> to vector<128x128xbf16>
    %cst_20 = arith.constant dense<0.000000e+00> : vector<32x128xf32>
    %21 = tpu.matmul %18, %20, %cst_20 {dimension_numbers = #tpu.dot_dimension_numbers<[1], [0], [0], [1], [0, 0, 1, 1], [], []>} : vector<32x128xbf16>, vector<128x128xbf16>, vector<32x128xf32> -> vector<32x128xf32>
    %c0_21 = arith.constant 0 : index
    %c1_22 = arith.constant 1 : index
    %c0_23 = arith.constant 0 : index
    %22 = vector.load %arg8[%c0_21, %c1_22, %c0_23] : memref<2x18x128xbf16, #tpu.memory_space<vmem>>, vector<2x16x128xbf16>
    %23 = vector.shape_cast %22 : vector<2x16x128xbf16> to vector<32x128xbf16>
    %c1_24 = arith.constant 1 : index
    %c0_25 = arith.constant 0 : index
    %c0_26 = arith.constant 0 : index
    %24 = vector.load %arg4[%c1_24, %c0_25, %c0_26] : memref<3x128x128xbf16, #tpu.memory_space<vmem>>, vector<1x128x128xbf16>
    %25 = vector.shape_cast %24 : vector<1x128x128xbf16> to vector<128x128xbf16>
    %cst_27 = arith.constant dense<0.000000e+00> : vector<32x128xf32>
    %26 = tpu.matmul %23, %25, %cst_27 {dimension_numbers = #tpu.dot_dimension_numbers<[1], [0], [0], [1], [0, 0, 1, 1], [], []>} : vector<32x128xbf16>, vector<128x128xbf16>, vector<32x128xf32> -> vector<32x128xf32>
    %27 = arith.addf %21, %26 : vector<32x128xf32>
    %c0_28 = arith.constant 0 : index
    %c2 = arith.constant 2 : index
    %c0_29 = arith.constant 0 : index
    %28 = vector.load %arg8[%c0_28, %c2, %c0_29] : memref<2x18x128xbf16, #tpu.memory_space<vmem>>, vector<2x16x128xbf16>
    %29 = vector.shape_cast %28 : vector<2x16x128xbf16> to vector<32x128xbf16>
    %c2_30 = arith.constant 2 : index
    %c0_31 = arith.constant 0 : index
    %c0_32 = arith.constant 0 : index
    %30 = vector.load %arg4[%c2_30, %c0_31, %c0_32] : memref<3x128x128xbf16, #tpu.memory_space<vmem>>, vector<1x128x128xbf16>
    %31 = vector.shape_cast %30 : vector<1x128x128xbf16> to vector<128x128xbf16>
    %cst_33 = arith.constant dense<0.000000e+00> : vector<32x128xf32>
    %32 = tpu.matmul %29, %31, %cst_33 {dimension_numbers = #tpu.dot_dimension_numbers<[1], [0], [0], [1], [0, 0, 1, 1], [], []>} : vector<32x128xbf16>, vector<128x128xbf16>, vector<32x128xf32> -> vector<32x128xf32>
    %33 = arith.addf %27, %32 : vector<32x128xf32>
    %cst_34 = arith.constant dense<0.000000e+00> : vector<128xf32>
    %34 = vector.multi_reduction <add>, %33, %cst_34 [0] : vector<32x128xf32> to vector<128xf32>
    %35 = vector.shape_cast %34 : vector<128xf32> to vector<1x128xf32>
    %c0_35 = arith.constant 0 : index
    %c0_36 = arith.constant 0 : index
    %c0_37 = arith.constant 0 : index
    %36 = vector.load %arg7[%c0_35, %c0_36, %c0_37] : memref<1x2x128xf32, #tpu.memory_space<vmem>>, vector<1x1x128xf32>
    %37 = vector.shape_cast %36 : vector<1x1x128xf32> to vector<1x128xf32>
    %38 = vector.shape_cast %35 : vector<1x128xf32> to vector<1x1x128xf32>
    tpu.vector_store %arg7[%c0_35, %c0_36, %c0_37], %38 {strides = array<i32>} : memref<1x2x128xf32, #tpu.memory_space<vmem>>, vector<1x1x128xf32>,
    %39 = arith.mulf %33, %33 : vector<32x128xf32>
    %cst_38 = arith.constant dense<0.000000e+00> : vector<128xf32>
    %40 = vector.multi_reduction <add>, %39, %cst_38 [0] : vector<32x128xf32> to vector<128xf32>
    %41 = vector.shape_cast %40 : vector<128xf32> to vector<1x128xf32>
    %c0_39 = arith.constant 0 : index
    %c1_40 = arith.constant 1 : index
    %c0_41 = arith.constant 0 : index
    %42 = vector.load %arg7[%c0_39, %c1_40, %c0_41] : memref<1x2x128xf32, #tpu.memory_space<vmem>>, vector<1x1x128xf32>
    %43 = vector.shape_cast %42 : vector<1x1x128xf32> to vector<1x128xf32>
    %44 = vector.shape_cast %41 : vector<1x128xf32> to vector<1x1x128xf32>
    tpu.vector_store %arg7[%c0_39, %c1_40, %c0_41], %44 {strides = array<i32>} : memref<1x2x128xf32, #tpu.memory_space<vmem>>, vector<1x1x128xf32>,
    %c0_42 = arith.constant 0 : index
    %c0_43 = arith.constant 0 : index
    %45 = vector.load %arg5[%c0_42, %c0_43] : memref<1x128xf32, #tpu.memory_space<vmem>>, vector<1x128xf32>
    %46 = vector.broadcast %45 : vector<1x128xf32> to vector<32x128xf32>
    %47 = arith.addf %33, %46 : vector<32x128xf32>
    %48 = vector.shape_cast %47 : vector<32x128xf32> to vector<2x16x128xf32>
    %c0_44 = arith.constant 0 : index
    %c0_45 = arith.constant 0 : index
    %c0_46 = arith.constant 0 : index
    %49 = vector.load %arg6[%c0_44, %c0_45, %c0_46] : memref<2x16x128xf32, #tpu.memory_space<vmem>>, vector<2x16x128xf32>
    tpu.vector_store %arg6[%c0_44, %c0_45, %c0_46], %48 {strides = array<i32>} : memref<2x16x128xf32, #tpu.memory_space<vmem>>, vector<2x16x128xf32>,
    return
  }
  func.func @transform_0(%arg0: i32) -> (i32, i32) {
    %c0_i32 = arith.constant 0 : i32
    %c0_i32_0 = arith.constant 0 : i32
    %c0_i32_1 = arith.constant 0 : i32
    return %c0_i32, %c0_i32_0 : i32, i32
  }
  func.func @transform_1(%arg0: i32) -> (i32, i32) {
    %c0_i32 = arith.constant 0 : i32
    %c0_i32_0 = arith.constant 0 : i32
    %c0_i32_1 = arith.constant 0 : i32
    return %c0_i32, %c0_i32_0 : i32, i32
  }
  func.func @transform_2(%arg0: i32) -> (i32, i32, i32) {
    %c0_i32 = arith.constant 0 : i32
    %c0_i32_0 = arith.constant 0 : i32
    %c0_i32_1 = arith.constant 0 : i32
    return %arg0, %c0_i32, %c0_i32_0 : i32, i32, i32
  }
  func.func @transform_3(%arg0: i32) -> (i32, i32, i32) {
    %c0_i32 = arith.constant 0 : i32
    %c0_i32_0 = arith.constant 0 : i32
    %c0_i32_1 = arith.constant 0 : i32
    %c0_i32_2 = arith.constant 0 : i32
    return %c0_i32, %c0_i32_0, %c0_i32_1 : i32, i32, i32
  }
  func.func @transform_4(%arg0: i32) -> (i32, i32) {
    %c0_i32 = arith.constant 0 : i32
    %c0_i32_0 = arith.constant 0 : i32
    %c0_i32_1 = arith.constant 0 : i32
    return %c0_i32, %c0_i32_0 : i32, i32
  }
  func.func @transform_5(%arg0: i32) -> (i32, i32, i32) {
    %c0_i32 = arith.constant 0 : i32
    %c0_i32_0 = arith.constant 0 : i32
    %c0_i32_1 = arith.constant 0 : i32
    return %arg0, %c0_i32, %c0_i32_0 : i32, i32, i32
  }
  func.func @transform_6(%arg0: i32) -> (i32, i32, i32) {
    %c0_i32 = arith.constant 0 : i32
    %c0_i32_0 = arith.constant 0 : i32
    %c0_i32_1 = arith.constant 0 : i32
    return %arg0, %c0_i32, %c0_i32_0 : i32, i32, i32
  }
}

module attributes {stable_mosaic.version = 11 : i64} {
  func.func @_bn_relu_kernel(%arg0: i32, %arg1: memref<32x128xf32, #tpu.memory_space<vmem>>, %arg2: memref<1x128xf32, #tpu.memory_space<vmem>>, %arg3: memref<1x128xf32, #tpu.memory_space<vmem>>, %arg4: memref<32x128xf32, #tpu.memory_space<vmem>>) attributes {dimension_semantics = [#tpu.dimension_semantics<parallel>], iteration_bounds = array<i64: 1>, scalar_prefetch = 0 : i64, scratch_operands = 0 : i64, tpu.core_type = #tpu.core_type<tc>, window_params = [{transform_indices = @transform_0, window_bounds = array<i64: 32, 128>}, {pipeline_mode = #tpu.pipeline_mode<synchronous>, transform_indices = @transform_1, window_bounds = array<i64: 1, 128>}, {pipeline_mode = #tpu.pipeline_mode<synchronous>, transform_indices = @transform_2, window_bounds = array<i64: 1, 128>}, {transform_indices = @transform_3, window_bounds = array<i64: 32, 128>}]} {
    %c0 = arith.constant 0 : index
    %c0_0 = arith.constant 0 : index
    %0 = vector.load %arg1[%c0, %c0_0] : memref<32x128xf32, #tpu.memory_space<vmem>>, vector<32x128xf32>
    %c0_1 = arith.constant 0 : index
    %c0_2 = arith.constant 0 : index
    %1 = vector.load %arg2[%c0_1, %c0_2] : memref<1x128xf32, #tpu.memory_space<vmem>>, vector<1x128xf32>
    %2 = vector.broadcast %1 : vector<1x128xf32> to vector<32x128xf32>
    %3 = arith.mulf %0, %2 : vector<32x128xf32>
    %c0_3 = arith.constant 0 : index
    %c0_4 = arith.constant 0 : index
    %4 = vector.load %arg3[%c0_3, %c0_4] : memref<1x128xf32, #tpu.memory_space<vmem>>, vector<1x128xf32>
    %5 = vector.broadcast %4 : vector<1x128xf32> to vector<32x128xf32>
    %6 = arith.addf %3, %5 : vector<32x128xf32>
    %cst = arith.constant 0.000000e+00 : f32
    %7 = vector.broadcast %cst : f32 to vector<32x128xf32>
    %8 = arith.maximumf %6, %7 : vector<32x128xf32>
    %c0_5 = arith.constant 0 : index
    %c0_6 = arith.constant 0 : index
    %9 = vector.load %arg4[%c0_5, %c0_6] : memref<32x128xf32, #tpu.memory_space<vmem>>, vector<32x128xf32>
    tpu.vector_store %arg4[%c0_5, %c0_6], %8 {strides = array<i32>} : memref<32x128xf32, #tpu.memory_space<vmem>>, vector<32x128xf32>,
    return
  }
  func.func @transform_0(%arg0: i32) -> (i32, i32) {
    %c0_i32 = arith.constant 0 : i32
    %c0_i32_0 = arith.constant 0 : i32
    return %arg0, %c0_i32 : i32, i32
  }
  func.func @transform_1(%arg0: i32) -> (i32, i32) {
    %c0_i32 = arith.constant 0 : i32
    %c0_i32_0 = arith.constant 0 : i32
    %c0_i32_1 = arith.constant 0 : i32
    return %c0_i32, %c0_i32_0 : i32, i32
  }
  func.func @transform_2(%arg0: i32) -> (i32, i32) {
    %c0_i32 = arith.constant 0 : i32
    %c0_i32_0 = arith.constant 0 : i32
    %c0_i32_1 = arith.constant 0 : i32
    return %c0_i32, %c0_i32_0 : i32, i32
  }
  func.func @transform_3(%arg0: i32) -> (i32, i32) {
    %c0_i32 = arith.constant 0 : i32
    %c0_i32_0 = arith.constant 0 : i32
    return %arg0, %c0_i32 : i32, i32
  }
}

</mosaic_0001>

<llo_original>
// kernel: tile.33
$region0: #{tile.33}
  #allocation0 [shape = 's32[1]{0}', space=sflag, size = 0x4, scoped, tag = 'scoped memory for tile.33']
  %s0 = inlined_call_operand.vmem [shape: f32[8], index: 0, kind: input, shape index: {}]
  %s1 = inlined_call_operand.vmem [shape: f32[16,8], index: 1, kind: output, shape index: {}]
  // Predicated region
  $region2: #{tile.33} parent=0 // pred_check
    _
  $region3: #{tile.33} parent=0 // pred_check_branch
    %3 = sbr.rel (0) target = $region5
  $region4: #{tile.33} parent=0 // pred_region
    _
  $region5: #{tile.33} parent=0 // pred_fallthru
    _
  %v4 = vld [vmem:[%s0] ss:$0 sm:$0xff]
  %5 = vst [vmem:[%s1] sm:$0xff] %v4
  %s6 = scalar_lea.vmem %s1, 8
  %7 = vst [vmem:[%s6] sm:$0xff] %v4

// kernel: tile.34
$region0: #{tile.34}
  %s0 = inlined_call_operand.vmem [shape: f32[16,8], index: 0, kind: input, shape index: {}]
  %s1 = inlined_call_operand.vmem [shape: f32[1,128], index: 1, kind: output, shape index: {}]
  $region1: #{tile.34} parent=0
    #allocation0 [shape = 'u8[4096]{0}', space=vmem, size = 0x1000, scoped, tag = 'scoped mem for output reshape']
    %v2 = vld [vmem:[%s0] sm:$0x1]
    %vm3 = vcmask 64512
    %4 = vst.msk [vmem:[#allocation0] sm:$0x1] %vm3, %v2
    %s5 = scalar_lea.vmem %s0, 15
    %v6 = vld [vmem:[%s5] sm:$0x1]
    %7 = vrot.lane.b32.xlu0 %v6, 120
    %v8 = vpop.permute.xlu0 %7
    %vm9 = vcmask 1048512
    %10 = vst.msk [vmem:[#allocation0] sm:$0x1] %vm9, %v8
    %s11 = scalar_lea.vmem %s0, 14
    %v12 = vld [vmem:[%s11] sm:$0x1]
    %13 = vrot.lane.b32.xlu0 %v12, 112
    %v14 = vpop.permute.xlu0 %13
    %vm15 = vcmask 982912
    %16 = vst.msk [vmem:[#allocation0] sm:$0x1] %vm15, %v14
    %s17 = scalar_lea.vmem %s0, 13
    %v18 = vld [vmem:[%s17] sm:$0x1]
    %19 = vrot.lane.b32.xlu0 %v18, 104
    %v20 = vpop.permute.xlu0 %19
    %vm21 = vcmask 917312
    %22 = vst.msk [vmem:[#allocation0] sm:$0x1] %vm21, %v20
    %s23 = scalar_lea.vmem %s0, 12
    %v24 = vld [vmem:[%s23] sm:$0x1]
    %25 = vrot.lane.b32.xlu0 %v24, 96
    %v26 = vpop.permute.xlu0 %25
    %vm27 = vcmask 851712
    %28 = vst.msk [vmem:[#allocation0] sm:$0x1] %vm27, %v26
    %s29 = scalar_lea.vmem %s0, 11
    %v30 = vld [vmem:[%s29] sm:$0x1]
    %31 = vrot.lane.b32.xlu0 %v30, 88
    %v32 = vpop.permute.xlu0 %31
    %vm33 = vcmask 786112
    %34 = vst.msk [vmem:[#allocation0] sm:$0x1] %vm33, %v32
    %s35 = scalar_lea.vmem %s0, 10
    %v36 = vld [vmem:[%s35] sm:$0x1]
    %37 = vrot.lane.b32.xlu0 %v36, 80
    %v38 = vpop.permute.xlu0 %37
    %vm39 = vcmask 720512
    %40 = vst.msk [vmem:[#allocation0] sm:$0x1] %vm39, %v38
    %s41 = scalar_lea.vmem %s0, 9
    %v42 = vld [vmem:[%s41] sm:$0x1]
    %43 = vrot.lane.b32.xlu0 %v42, 72
    %v44 = vpop.permute.xlu0 %43
    %vm45 = vcmask 654912
    %46 = vst.msk [vmem:[#allocation0] sm:$0x1] %vm45, %v44
    %s47 = scalar_lea.vmem %s0, 8
    %v48 = vld [vmem:[%s47] sm:$0x1]
    %49 = vrot.lane.b32.xlu0 %v48, 64
    %v50 = vpop.permute.xlu0 %49
    %vm51 = vcmask 589312
    %52 = vst.msk [vmem:[#allocation0] sm:$0x1] %vm51, %v50
    %s53 = scalar_lea.vmem %s0, 7
    %v54 = vld [vmem:[%s53] sm:$0x1]
    %55 = vrot.lane.b32.xlu0 %v54, 56
    %v56 = vpop.permute.xlu0 %55
    %vm57 = vcmask 523712
    %58 = vst.msk [vmem:[#allocation0] sm:$0x1] %vm57, %v56
    %s59 = scalar_lea.vmem %s0, 6
    %v60 = vld [vmem:[%s59] sm:$0x1]
    %61 = vrot.lane.b32.xlu0 %v60, 48
    %v62 = vpop.permute.xlu0 %61
    %vm63 = vcmask 458112
    %64 = vst.msk [vmem:[#allocation0] sm:$0x1] %vm63, %v62
    %s65 = scalar_lea.vmem %s0, 5
    %v66 = vld [vmem:[%s65] sm:$0x1]
    %67 = vrot.lane.b32.xlu0 %v66, 40
    %v68 = vpop.permute.xlu0 %67
    %vm69 = vcmask 392512
    %70 = vst.msk [vmem:[#allocation0] sm:$0x1] %vm69, %v68
    %s71 = scalar_lea.vmem %s0, 4
    %v72 = vld [vmem:[%s71] sm:$0x1]
    %73 = vrot.lane.b32.xlu0 %v72, 32
    %v74 = vpop.permute.xlu0 %73
    %vm75 = vcmask 326912
    %76 = vst.msk [vmem:[#allocation0] sm:$0x1] %vm75, %v74
    %s77 = scalar_lea.vmem %s0, 3
    %v78 = vld [vmem:[%s77] sm:$0x1]
    %79 = vrot.lane.b32.xlu0 %v78, 24
    %v80 = vpop.permute.xlu0 %79
    %vm81 = vcmask 261312
    %82 = vst.msk [vmem:[#allocation0] sm:$0x1] %vm81, %v80
    %s83 = scalar_lea.vmem %s0, 2
    %v84 = vld [vmem:[%s83] sm:$0x1]
    %85 = vrot.lane.b32.xlu0 %v84, 16
    %v86 = vpop.permute.xlu0 %85
    %vm87 = vcmask 195712
    %88 = vst.msk [vmem:[#allocation0] sm:$0x1] %vm87, %v86
    %s89 = scalar_lea.vmem %s0, 1
    %v90 = vld [vmem:[%s89] sm:$0x1]
    %91 = vrot.lane.b32.xlu0 %v90, 8
    %v92 = vpop.permute.xlu0 %91
    %vm93 = vcmask 130112
    %94 = vst.msk [vmem:[#allocation0] sm:$0x1] %vm93, %v92
    %s96 = sshllo.u32 0, 1
    %v98 = vld [vmem:[#allocation0] sm:%s96]
    %s99 = sshllo.u32 0, 1
    %100 = vst [vmem:[%s1] sm:%s99] %v98

// kernel: upsample_conv_forward.3
$region0: #{upsample_conv_forward.3}
  #allocation0 [shape = 'u32[]', space=smem, size = 0x4, offset = 0x4, fixed_abs, tag = 'smem constant byte address 0x4 - core index']
  #allocation1 [shape = 'u32[144,128]{1,0:T(1,128)}', space=vmem, size = 0x12000, scoped, tag = 'internal scratch']
  #allocation2 [shape = 'bf16[2,18,64]{2,1,0:T(8,128)(2,1)}', space=vmem, size = 0x3000, scoped, tag = 'scratch operand']
  %s0 = inlined_call_operand.vmem [shape: f32[2,16,64], index: 0, kind: input, shape index: {}]
  %s1 = inlined_call_operand.vmem [shape: bf16[3,64,128], index: 1, kind: input, shape index: {}]
  %s2 = inlined_call_operand.vmem [shape: f32[1,128], index: 2, kind: input, shape index: {}]
  %s3 = inlined_call_operand.vmem [shape: bf16[2,16,128], index: 3, kind: output, shape index: {0}]
  %s4 = inlined_call_operand.vmem [shape: f32[1,2,128], index: 4, kind: output, shape index: {1}]
  %5 = xla_tuple %s3, %s4
  %s6 = sld [smem:[#allocation0]]
  $region30: #{upsample_conv_forward.3} parent=0
    _
  %s8 = ssub.s32 1, %s6
  %s9 = scalar_select 0, %s8, %s6
  // Predicated region
  $region2: #{upsample_conv_forward.3} parent=0 // pred_check
    _
  $region3: #{upsample_conv_forward.3} parent=0 // pred_check_branch
    %11 = sbr.rel (0) target = $region5
  $region4: #{upsample_conv_forward.3} parent=0 // pred_region
    _
  $region5: #{upsample_conv_forward.3} parent=0 // pred_fallthru
    _
  // Predicated region
  $region6: #{upsample_conv_forward.3} parent=0 // pred_check
    _
  $region7: #{upsample_conv_forward.3} parent=0 // pred_check_branch
    %13 = sbr.rel (0) target = $region9
  $region8: #{upsample_conv_forward.3} parent=0 // pred_region
    _
  $region9: #{upsample_conv_forward.3} parent=0 // pred_fallthru
    _
  // Predicated region
  $region10: #{upsample_conv_forward.3} parent=0 // pred_check
    _
  $region11: #{upsample_conv_forward.3} parent=0 // pred_check_branch
    %15 = sbr.rel (0) target = $region13
  $region12: #{upsample_conv_forward.3} parent=0 // pred_region
    _
  $region13: #{upsample_conv_forward.3} parent=0 // pred_fallthru
    _
  %v17 = vld [vmem:[%s0] sm:$0xff]
  %v18 = vld [vmem:[%s0 + $0x8] sm:$0xff]
  %v19 = vld [vmem:[%s0 + $0x10] sm:$0xff]
  %v20 = vld [vmem:[%s0 + $0x18] sm:$0xff]
  %vm21 = vcmask 516096
  %vm22 = vsmask.f32 256
  %vm23 = vmand %vm21, %vm22
  %v24 = vld [vmem:[#allocation2] sm:$0x1]
  %v25 = vsel %vm23, 0, %v24
  %26 = vst [vmem:[#allocation2] sm:$0x1] %v25
  %v27 = vld [vmem:[#allocation2 + $0xc] sm:$0x1]
  %v28 = vsel %vm23, 0, %v27
  %29 = vst [vmem:[#allocation2 + $0xc] sm:$0x1] %v28
  %vm30 = vsmask.f32 7938
  %vm31 = vmand %vm21, %vm30
  %v32 = vld [vmem:[#allocation2 + $0x8] sm:$0x1]
  %v33 = vsel %vm31, 0, %v32
  %34 = vst [vmem:[#allocation2 + $0x8] sm:$0x1] %v33
  %v35 = vld [vmem:[#allocation2 + $0x14] sm:$0x1]
  %v36 = vsel %vm31, 0, %v35
  %37 = vst [vmem:[#allocation2 + $0x14] sm:$0x1] %v36
  %v38 = vpack.c.bf16 %v18, %v17
  %v39 = vpack.c.bf16 %v20, %v19
  %v42 = vunpack.c.l.b16 %v38
  %v43 = vunpack.c.h.b16 %v38
  %v44 = vunpack.c.l.b16 %v39
  %v45 = vunpack.c.h.b16 %v39
  %v46 = vpack.c.b16 %v42, %v42
  %v47 = vpack.c.b16 %v43, %v43
  %v48 = vpack.c.b16 %v44, %v44
  %v49 = vpack.c.b16 %v45, %v45
  %vm50 = vsmask.f32 4368
  %vm51 = vmor %vm22, %vm50
  %v53 = vshrl.u32 %v46, 16
  %v55 = vrot.slane %v53, 7
  %v56 = vshll.u32 %v46, 16
  %v58 = vor.u32 %v55, %v56
  %v59 = vrot.slane %v55, 4
  %v61 = vshrl.u32 %v47, 16
  %v63 = vrot.slane %v61, 7
  %v64 = vshll.u32 %v47, 16
  %v66 = vor.u32 %v63, %v64
  %v67 = vsel %vm51, %v59, %v66
  %v68 = vrot.slane %v63, 4
  %v70 = vshrl.u32 %v48, 16
  %v72 = vrot.slane %v70, 7
  %v73 = vshll.u32 %v48, 16
  %v75 = vor.u32 %v72, %v73
  %v76 = vrot.slane %v72, 4
  %v78 = vshrl.u32 %v49, 16
  %v80 = vrot.slane %v78, 7
  %v81 = vshll.u32 %v49, 16
  %v83 = vor.u32 %v80, %v81
  %v84 = vsel %vm51, %v76, %v83
  %v85 = vrot.slane %v80, 4
  %vm92 = vcmask 519168
  %vm93 = vmand %vm92, %vm30
  %v94 = vld [vmem:[#allocation2] sm:$0xf]
  %v95 = vsel %vm93, %v58, %v94
  %96 = vst [vmem:[#allocation2] sm:$0xf] %v95
  %vm97 = vcmask 519168
  %98 = vst.msk [vmem:[#allocation2 + $0x4] sm:$0xf] %vm97, %v67
  %v99 = vld [vmem:[#allocation2 + $0x8] sm:$0x1]
  %v100 = vsel %vm23, %v68, %v99
  %101 = vst [vmem:[#allocation2 + $0x8] sm:$0x1] %v100
  %v102 = vld [vmem:[#allocation2 + $0xc] sm:$0xf]
  %v103 = vsel %vm93, %v75, %v102
  %104 = vst [vmem:[#allocation2 + $0xc] sm:$0xf] %v103
  %105 = vst.msk [vmem:[#allocation2 + $0x10] sm:$0xf] %vm97, %v84
  %v106 = vld [vmem:[#allocation2 + $0x14] sm:$0x1]
  %v107 = vsel %vm23, %v85, %v106
  %108 = vst [vmem:[#allocation2 + $0x14] sm:$0x1] %v107
  %v109 = vld [vmem:[#allocation2] sm:$0xf]
  %v110 = vld [vmem:[#allocation2 + $0x4] sm:$0xf]
  %v111 = vld [vmem:[#allocation2 + $0xc] sm:$0xf]
  %v112 = vld [vmem:[#allocation2 + $0x10] sm:$0xf]
  %v113 = vld [vmem:[%s1] sm:$0xf]
  %v114 = vld [vmem:[%s1 + $0x4] sm:$0xf]
  %v115 = vld [vmem:[%s1 + $0x8] sm:$0xf]
  %v116 = vld [vmem:[%s1 + $0xc] sm:$0xf]
  %v117 = vld [vmem:[%s1 + $0x10] sm:$0xf]
  %v118 = vld [vmem:[%s1 + $0x14] sm:$0xf]
  %v119 = vld [vmem:[%s1 + $0x18] sm:$0xf]
  %v120 = vld [vmem:[%s1 + $0x1c] sm:$0xf]
  %v121 = vld [vmem:[#allocation2 + $0x8] sm:$0x1]
  %v122 = vld [vmem:[#allocation2 + $0x14] sm:$0x1]
  %vm123 = vsmask.f32 3328
  %vm124 = vsmask.f32 7440
  %vm125 = vmor %vm123, %vm124
  %v127 = vshrl.u32 %v109, 16
  %v129 = vrot.slane %v127, 4
  %v130 = vshll.u32 %v109, 16
  %v132 = vrot.slane %v130, 5
  %v133 = vor.u32 %v129, %v132
  %v134 = vrot.slane %v133, 4
  %v136 = vshll.u32 %v110, 16
  %v138 = vrot.slane %v136, 5
  %v139 = vsel %vm125, %v134, %v138
  %v140 = vshrl.u32 %v110, 16
  %v142 = vrot.slane %v140, 4
  %v143 = vor.u32 %v142, %v138
  %v144 = vrot.slane %v143, 4
  %v146 = vshll.u32 %v121, 16
  %v148 = vrot.slane %v146, 5
  %v149 = vsel %vm125, %v144, %v148
  %v151 = vshrl.u32 %v111, 16
  %v153 = vrot.slane %v151, 4
  %v154 = vshll.u32 %v111, 16
  %v156 = vrot.slane %v154, 5
  %v157 = vor.u32 %v153, %v156
  %v158 = vrot.slane %v157, 4
  %v160 = vshll.u32 %v112, 16
  %v162 = vrot.slane %v160, 5
  %v163 = vsel %vm125, %v158, %v162
  %v164 = vshrl.u32 %v112, 16
  %v166 = vrot.slane %v164, 4
  %v167 = vor.u32 %v166, %v162
  %v168 = vrot.slane %v167, 4
  %v170 = vshll.u32 %v122, 16
  %v172 = vrot.slane %v170, 5
  %v173 = vsel %vm125, %v168, %v172
  %s174 = scalar_lea.vmem %s1, 32
  %v175 = vld [vmem:[%s174] sm:$0xf]
  %v176 = vld [vmem:[%s174 + $0x4] sm:$0xf]
  %v177 = vld [vmem:[%s174 + $0x8] sm:$0xf]
  %v178 = vld [vmem:[%s174 + $0xc] sm:$0xf]
  %v179 = vld [vmem:[%s174 + $0x10] sm:$0xf]
  %v180 = vld [vmem:[%s174 + $0x14] sm:$0xf]
  %v181 = vld [vmem:[%s174 + $0x18] sm:$0xf]
  %v182 = vld [vmem:[%s174 + $0x1c] sm:$0xf]
  %v183 = vunpack.c.l.b16 %v139
  %v184 = vunpack.c.l.b16 %v149
  %v185 = vunpack.c.l.b16 %v163
  %v186 = vunpack.c.l.b16 %v173
  %v187 = vpack.c.b16 %v184, %v183
  %v188 = vpack.c.b16 %v186, %v185
  %v197 = vunpack.c.l.b16 %v175
  %v198 = vunpack.c.l.b16 %v176
  %v199 = vunpack.c.l.b16 %v177
  %v200 = vunpack.c.l.b16 %v178
  %v201 = vunpack.c.l.b16 %v179
  %v202 = vunpack.c.l.b16 %v180
  %v203 = vunpack.c.l.b16 %v181
  %v204 = vunpack.c.l.b16 %v182
  %v205 = vpack.c.b16 %v198, %v197
  %v206 = vpack.c.b16 %v200, %v199
  %v207 = vpack.c.b16 %v202, %v201
  %v208 = vpack.c.b16 %v204, %v203
  %vm213 = vcmask 523264
  %v215 = vsel %vm213, %v187, 0
  %v218 = vsel %vm213, %v188, 0
  %220 = vmatprep.subr.bf16.mxu0 0
  %221 = vmatpush1.bf16.msra.mxu0 %v205
  %222 = vmatprep.subr.bf16.mxu0 0
  %223 = vmatpush1.bf16.msra.mxu0 %v206
  %224 = vmatprep.subr.bf16.mxu0 0
  %225 = vmatpush1.bf16.msra.mxu0 %v207
  %226 = vmatprep.subr.bf16.mxu0 0
  %227 = vmatpush1.bf16.msra.mxu0 %v208
  %228 = vmatprep.subr.bf16.mxu0 0
  %229 = vmatpush1.bf16.msra.mxu0 0
  %230 = vmatprep.subr.bf16.mxu0 0
  %231 = vmatpush1.bf16.msra.mxu0 0
  %232 = vmatprep.subr.bf16.mxu0 0
  %233 = vmatpush1.bf16.msra.mxu0 0
  %234 = vmatprep.subr.bf16.mxu0 0
  %235 = vmatpush1.bf16.msra.mxu0 0
  %236 = vmatprep.subr.bf16.mxu0 0
  %237 = vmatpush1.bf16.msra.mxu0 0
  %238 = vmatprep.subr.bf16.mxu0 0
  %239 = vmatpush1.bf16.msra.mxu0 0
  %240 = vmatprep.subr.bf16.mxu0 0
  %241 = vmatpush1.bf16.msra.mxu0 0
  %242 = vmatprep.subr.bf16.mxu0 0
  %243 = vmatpush1.bf16.msra.mxu0 0
  %244 = vmatprep.subr.bf16.mxu0 0
  %245 = vmatpush1.bf16.msra.mxu0 0
  %246 = vmatprep.subr.bf16.mxu0 0
  %247 = vmatpush1.bf16.msra.mxu0 0
  %248 = vmatprep.subr.bf16.mxu0 0
  %249 = vmatpush1.bf16.msra.mxu0 0
  %250 = vmatprep.subr.bf16.mxu0 0
  %251 = vmatpush1.bf16.msra.mxu0 0
  %252 = vmatprep.mubr.bf16.mxu0 0
  %253 = vmatmul.mubr.bf16.gmra.mrb[0].mxu0 %v215
  %v254 = vpop.f32.mrb[0].mxu0
  %v255 = vadd.f32 0.0, %v254
  %v256 = vpop.f32.mrb[0].mxu0
  %v257 = vpop.f32.mrb[0].mxu0
  %v258 = vadd.f32 0.0, %v257
  %v259 = vpop.f32.mrb[0].mxu0
  %260 = vmatprep.mubr.bf16.mxu0 0
  %261 = vmatmul.mubr.bf16.gmra.mrb[0].mxu0 %v218
  %v262 = vpop.f32.mrb[0].mxu0
  %v263 = vadd.f32 0.0, %v262
  %v264 = vpop.f32.mrb[0].mxu0
  %v265 = vpop.f32.mrb[0].mxu0
  %v266 = vadd.f32 0.0, %v265
  %v267 = vpop.f32.mrb[0].mxu0
  %268 = vdwg.mxu0
  %v273 = vunpack.c.l.b16 %v109
  %v274 = vunpack.c.l.b16 %v110
  %v275 = vunpack.c.l.b16 %v111
  %v276 = vunpack.c.l.b16 %v112
  %v277 = vpack.c.b16 %v274, %v273
  %v278 = vpack.c.b16 %v276, %v275
  %v287 = vunpack.c.l.b16 %v113
  %v288 = vunpack.c.l.b16 %v114
  %v289 = vunpack.c.l.b16 %v115
  %v290 = vunpack.c.l.b16 %v116
  %v291 = vunpack.c.l.b16 %v117
  %v292 = vunpack.c.l.b16 %v118
  %v293 = vunpack.c.l.b16 %v119
  %v294 = vunpack.c.l.b16 %v120
  %v295 = vpack.c.b16 %v288, %v287
  %v296 = vpack.c.b16 %v290, %v289
  %v297 = vpack.c.b16 %v292, %v291
  %v298 = vpack.c.b16 %v294, %v293
  %v304 = vsel %vm213, %v277, 0
  %v307 = vsel %vm213, %v278, 0
  %309 = vmatprep.subr.bf16.mxu0 0
  %310 = vmatpush1.bf16.msra.mxu0 %v295
  %311 = vmatprep.subr.bf16.mxu0 0
  %312 = vmatpush1.bf16.msra.mxu0 %v296
  %313 = vmatprep.subr.bf16.mxu0 0
  %314 = vmatpush1.bf16.msra.mxu0 %v297
  %315 = vmatprep.subr.bf16.mxu0 0
  %316 = vmatpush1.bf16.msra.mxu0 %v298
  %317 = vmatprep.subr.bf16.mxu0 0
  %318 = vmatpush1.bf16.msra.mxu0 0
  %319 = vmatprep.subr.bf16.mxu0 0
  %320 = vmatpush1.bf16.msra.mxu0 0
  %321 = vmatprep.subr.bf16.mxu0 0
  %322 = vmatpush1.bf16.msra.mxu0 0
  %323 = vmatprep.subr.bf16.mxu0 0
  %324 = vmatpush1.bf16.msra.mxu0 0
  %325 = vmatprep.subr.bf16.mxu0 0
  %326 = vmatpush1.bf16.msra.mxu0 0
  %327 = vmatprep.subr.bf16.mxu0 0
  %328 = vmatpush1.bf16.msra.mxu0 0
  %329 = vmatprep.subr.bf16.mxu0 0
  %330 = vmatpush1.bf16.msra.mxu0 0
  %331 = vmatprep.subr.bf16.mxu0 0
  %332 = vmatpush1.bf16.msra.mxu0 0
  %333 = vmatprep.subr.bf16.mxu0 0
  %334 = vmatpush1.bf16.msra.mxu0 0
  %335 = vmatprep.subr.bf16.mxu0 0
  %336 = vmatpush1.bf16.msra.mxu0 0
  %337 = vmatprep.subr.bf16.mxu0 0
  %338 = vmatpush1.bf16.msra.mxu0 0
  %339 = vmatprep.subr.bf16.mxu0 0
  %340 = vmatpush1.bf16.msra.mxu0 0
  %341 = vmatprep.mubr.bf16.mxu0 0
  %342 = vmatmul.mubr.bf16.gmra.mrb[0].mxu0 %v304
  %v343 = vpop.f32.mrb[0].mxu0
  %v344 = vadd.f32 %v255, %v343
  %v345 = vpop.f32.mrb[0].mxu0
  %v346 = vpop.f32.mrb[0].mxu0
  %v347 = vadd.f32 %v258, %v346
  %v348 = vpop.f32.mrb[0].mxu0
  %349 = vmatprep.mubr.bf16.mxu0 0
  %350 = vmatmul.mubr.bf16.gmra.mrb[0].mxu0 %v307
  %v351 = vpop.f32.mrb[0].mxu0
  %v352 = vadd.f32 %v263, %v351
  %v353 = vpop.f32.mrb[0].mxu0
  %v354 = vpop.f32.mrb[0].mxu0
  %v355 = vadd.f32 %v266, %v354
  %v356 = vpop.f32.mrb[0].mxu0
  %357 = vdwg.mxu0
  %v358 = vld [vmem:[#allocation2] sm:$0xe]
  %v359 = vld [vmem:[#allocation2 + $0xc] sm:$0xe]
  %vm364 = vcmask 1042432
  %vm365 = vcmask 1046532
  %vm366 = vmor %vm364, %vm365
  %v367 = vrot.slane %v358, 5
  %v368 = vrot.slane %v367, 4
  %v369 = vrot.slane %v110, 5
  %v370 = vsel %vm366, %v368, %v369
  %v371 = vrot.slane %v369, 4
  %v372 = vrot.slane %v121, 5
  %v373 = vsel %vm366, %v371, %v372
  %v374 = vrot.slane %v359, 5
  %v375 = vrot.slane %v374, 4
  %v376 = vrot.slane %v112, 5
  %v377 = vsel %vm366, %v375, %v376
  %v378 = vrot.slane %v376, 4
  %v379 = vrot.slane %v122, 5
  %v380 = vsel %vm366, %v378, %v379
  %s381 = scalar_lea.vmem %s1, 64
  %v382 = vld [vmem:[%s381] sm:$0xf]
  %v383 = vld [vmem:[%s381 + $0x4] sm:$0xf]
  %v384 = vld [vmem:[%s381 + $0x8] sm:$0xf]
  %v385 = vld [vmem:[%s381 + $0xc] sm:$0xf]
  %v386 = vld [vmem:[%s381 + $0x10] sm:$0xf]
  %v387 = vld [vmem:[%s381 + $0x14] sm:$0xf]
  %v388 = vld [vmem:[%s381 + $0x18] sm:$0xf]
  %v389 = vld [vmem:[%s381 + $0x1c] sm:$0xf]
  %v390 = vunpack.c.l.b16 %v370
  %v391 = vunpack.c.l.b16 %v373
  %v392 = vunpack.c.l.b16 %v377
  %v393 = vunpack.c.l.b16 %v380
  %v394 = vpack.c.b16 %v391, %v390
  %v395 = vpack.c.b16 %v393, %v392
  %v404 = vunpack.c.l.b16 %v382
  %v405 = vunpack.c.l.b16 %v383
  %v406 = vunpack.c.l.b16 %v384
  %v407 = vunpack.c.l.b16 %v385
  %v408 = vunpack.c.l.b16 %v386
  %v409 = vunpack.c.l.b16 %v387
  %v410 = vunpack.c.l.b16 %v388
  %v411 = vunpack.c.l.b16 %v389
  %v412 = vpack.c.b16 %v405, %v404
  %v413 = vpack.c.b16 %v407, %v406
  %v414 = vpack.c.b16 %v409, %v408
  %v415 = vpack.c.b16 %v411, %v410
  %v421 = vsel %vm213, %v394, 0
  %v424 = vsel %vm213, %v395, 0
  %426 = vmatprep.subr.bf16.mxu0 0
  %427 = vmatpush1.bf16.msra.mxu0 %v412
  %428 = vmatprep.subr.bf16.mxu0 0
  %429 = vmatpush1.bf16.msra.mxu0 %v413
  %430 = vmatprep.subr.bf16.mxu0 0
  %431 = vmatpush1.bf16.msra.mxu0 %v414
  %432 = vmatprep.subr.bf16.mxu0 0
  %433 = vmatpush1.bf16.msra.mxu0 %v415
  %434 = vmatprep.subr.bf16.mxu0 0
  %435 = vmatpush1.bf16.msra.mxu0 0
  %436 = vmatprep.subr.bf16.mxu0 0
  %437 = vmatpush1.bf16.msra.mxu0 0
  %438 = vmatprep.subr.bf16.mxu0 0
  %439 = vmatpush1.bf16.msra.mxu0 0
  %440 = vmatprep.subr.bf16.mxu0 0
  %441 = vmatpush1.bf16.msra.mxu0 0
  %442 = vmatprep.subr.bf16.mxu0 0
  %443 = vmatpush1.bf16.msra.mxu0 0
  %444 = vmatprep.subr.bf16.mxu0 0
  %445 = vmatpush1.bf16.msra.mxu0 0
  %446 = vmatprep.subr.bf16.mxu0 0
  %447 = vmatpush1.bf16.msra.mxu0 0
  %448 = vmatprep.subr.bf16.mxu0 0
  %449 = vmatpush1.bf16.msra.mxu0 0
  %450 = vmatprep.subr.bf16.mxu0 0
  %451 = vmatpush1.bf16.msra.mxu0 0
  %452 = vmatprep.subr.bf16.mxu0 0
  %453 = vmatpush1.bf16.msra.mxu0 0
  %454 = vmatprep.subr.bf16.mxu0 0
  %455 = vmatpush1.bf16.msra.mxu0 0
  %456 = vmatprep.subr.bf16.mxu0 0
  %457 = vmatpush1.bf16.msra.mxu0 0
  %458 = vmatprep.mubr.bf16.mxu0 0
  %459 = vmatmul.mubr.bf16.gmra.mrb[0].mxu0 %v421
  %v460 = vpop.f32.mrb[0].mxu0
  %v461 = vadd.f32 0.0, %v460
  %v462 = vpop.f32.mrb[0].mxu0
  %v463 = vpop.f32.mrb[0].mxu0
  %v464 = vadd.f32 0.0, %v463
  %v465 = vpop.f32.mrb[0].mxu0
  %466 = vmatprep.mubr.bf16.mxu0 0
  %467 = vmatmul.mubr.bf16.gmra.mrb[0].mxu0 %v424
  %v468 = vpop.f32.mrb[0].mxu0
  %v469 = vadd.f32 0.0, %v468
  %v470 = vpop.f32.mrb[0].mxu0
  %v471 = vpop.f32.mrb[0].mxu0
  %v472 = vadd.f32 0.0, %v471
  %v473 = vpop.f32.mrb[0].mxu0
  %474 = vdwg.mxu0
  %v475 = vadd.f32 %v344, %v461
  %v476 = vadd.f32 %v347, %v464
  %v477 = vadd.f32 %v352, %v469
  %v478 = vadd.f32 %v355, %v472
  %v479 = vadd.f32 %v475, %v476
  %v480 = vadd.f32 %v479, %v477
  %v481 = vadd.f32 %v480, %v478
  %v482 = vrot.slane %v481, 4
  %v483 = vadd.f32 %v481, %v482
  %v484 = vrot.slane %v483, 2
  %v485 = vadd.f32 %v483, %v484
  %v486 = vrot.slane %v485, 1
  %v487 = vadd.f32 %v485, %v486
  %488 = vst [vmem:[%s4] sm:$0x1] %v487
  %v489 = vmul.f32 %v475, %v475
  %v490 = vmul.f32 %v476, %v476
  %v491 = vmul.f32 %v477, %v477
  %v492 = vmul.f32 %v478, %v478
  %v493 = vadd.f32 %v489, %v490
  %v494 = vadd.f32 %v493, %v491
  %v495 = vadd.f32 %v494, %v492
  %v496 = vrot.slane %v495, 4
  %v497 = vadd.f32 %v495, %v496
  %v498 = vrot.slane %v497, 2
  %v499 = vadd.f32 %v497, %v498
  %v500 = vrot.slane %v499, 1
  %v501 = vadd.f32 %v499, %v500
  %502 = vst [vmem:[%s4 + $0x1] sm:$0x1] %v501
  %v503 = vld [vmem:[%s2] sm:$0x1]
  %v505 = vlaneseq
  %v506 = vshrl.u32 %v505, 7
  %v507 = vsub.s32 0, %v506
  %v508 = vrot.slane %v503, %v507
  %v510 = vadd.f32 %v475, %v508
  %v511 = vadd.f32 %v476, %v508
  %v512 = vadd.f32 %v477, %v508
  %v513 = vadd.f32 %v478, %v508
  %v514 = vpack.c.bf16 %v511, %v510
  %v515 = vpack.c.bf16 %v513, %v512
  %v518 = vunpack.c.l.b16 %v514
  %v519 = vunpack.c.h.b16 %v514
  %v520 = vunpack.c.l.b16 %v515
  %v521 = vunpack.c.h.b16 %v515
  %v522 = vpack.c.b16 %v518, %v518
  %v523 = vpack.c.b16 %v519, %v519
  %v524 = vpack.c.b16 %v520, %v520
  %v525 = vpack.c.b16 %v521, %v521
  %530 = vst [vmem:[%s3] sm:$0xf] %v522
  %531 = vst [vmem:[%s3 + $0x4] sm:$0xf] %v523
  %532 = vst [vmem:[%s3 + $0x8] sm:$0xf] %v524
  %533 = vst [vmem:[%s3 + $0xc] sm:$0xf] %v525
  // Predicated region
  $region14: #{upsample_conv_forward.3} parent=0 // pred_check
    _
  $region15: #{upsample_conv_forward.3} parent=0 // pred_check_branch
    %535 = sbr.rel (0) target = $region17
  $region16: #{upsample_conv_forward.3} parent=0 // pred_region
    _
  $region17: #{upsample_conv_forward.3} parent=0 // pred_fallthru
    _
  // Predicated region
  $region18: #{upsample_conv_forward.3} parent=0 // pred_check
    _
  $region19: #{upsample_conv_forward.3} parent=0 // pred_check_branch
    %537 = sbr.rel (0) target = $region21
  $region20: #{upsample_conv_forward.3} parent=0 // pred_region
    _
  $region21: #{upsample_conv_forward.3} parent=0 // pred_fallthru
    _
  // Predicated region
  $region22: #{upsample_conv_forward.3} parent=0 // pred_check
    _
  $region23: #{upsample_conv_forward.3} parent=0 // pred_check_branch
    %539 = sbr.rel (0) target = $region25
  $region24: #{upsample_conv_forward.3} parent=0 // pred_region
    _
  $region25: #{upsample_conv_forward.3} parent=0 // pred_fallthru
    _
  // Predicated region
  $region26: #{upsample_conv_forward.3} parent=0 // pred_check
    _
  $region27: #{upsample_conv_forward.3} parent=0 // pred_check_branch
    %541 = sbr.rel (0) target = $region29
  $region28: #{upsample_conv_forward.3} parent=0 // pred_region
    _
  $region29: #{upsample_conv_forward.3} parent=0 // pred_fallthru
    _

// kernel: upsample_conv_forward.5
$region0: #{upsample_conv_forward.5}
  #allocation0 [shape = 'u32[]', space=smem, size = 0x4, offset = 0x4, fixed_abs, tag = 'smem constant byte address 0x4 - core index']
  #allocation1 [shape = 'u32[144,128]{1,0:T(1,128)}', space=vmem, size = 0x12000, scoped, tag = 'internal scratch']
  %s0 = inlined_call_operand.vmem [shape: f32[32,128], index: 0, kind: input, shape index: {}]
  %s1 = inlined_call_operand.vmem [shape: f32[1,128], index: 1, kind: input, shape index: {}]
  %s2 = inlined_call_operand.vmem [shape: f32[1,128], index: 2, kind: input, shape index: {}]
  %s3 = inlined_call_operand.vmem [shape: f32[32,128], index: 3, kind: output, shape index: {}]
  %s4 = sld [smem:[#allocation0]]
  $region22: #{upsample_conv_forward.5} parent=0
    _
  %s6 = ssub.s32 1, %s4
  %s7 = scalar_select 0, %s6, %s4
  // Predicated region
  $region2: #{upsample_conv_forward.5} parent=0 // pred_check
    _
  $region3: #{upsample_conv_forward.5} parent=0 // pred_check_branch
    %9 = sbr.rel (0) target = $region5
  $region4: #{upsample_conv_forward.5} parent=0 // pred_region
    _
  $region5: #{upsample_conv_forward.5} parent=0 // pred_fallthru
    _
  // Predicated region
  $region6: #{upsample_conv_forward.5} parent=0 // pred_check
    _
  $region7: #{upsample_conv_forward.5} parent=0 // pred_check_branch
    %11 = sbr.rel (0) target = $region9
  $region8: #{upsample_conv_forward.5} parent=0 // pred_region
    _
  $region9: #{upsample_conv_forward.5} parent=0 // pred_fallthru
    _
  // Predicated region
  $region10: #{upsample_conv_forward.5} parent=0 // pred_check
    _
  $region11: #{upsample_conv_forward.5} parent=0 // pred_check_branch
    %13 = sbr.rel (0) target = $region13
  $region12: #{upsample_conv_forward.5} parent=0 // pred_region
    _
  $region13: #{upsample_conv_forward.5} parent=0 // pred_fallthru
    _
  %v14 = vld [vmem:[%s0] sm:$0xff]
  %v15 = vld [vmem:[%s0 + $0x8] sm:$0xff]
  %v16 = vld [vmem:[%s0 + $0x10] sm:$0xff]
  %v17 = vld [vmem:[%s0 + $0x18] sm:$0xff]
  %v18 = vld [vmem:[%s1] sm:$0x1]
  %v20 = vlaneseq
  %v21 = vshrl.u32 %v20, 7
  %v22 = vsub.s32 0, %v21
  %v23 = vrot.slane %v18, %v22
  %v25 = vmul.f32 %v14, %v23
  %v26 = vmul.f32 %v15, %v23
  %v27 = vmul.f32 %v16, %v23
  %v28 = vmul.f32 %v17, %v23
  %v29 = vld [vmem:[%s2] sm:$0x1]
  %v31 = vlaneseq
  %v32 = vshrl.u32 %v31, 7
  %v33 = vsub.s32 0, %v32
  %v34 = vrot.slane %v29, %v33
  %v36 = vadd.f32 %v25, %v34
  %v37 = vadd.f32 %v26, %v34
  %v38 = vadd.f32 %v27, %v34
  %v39 = vadd.f32 %v28, %v34
  %v40 = vmax.f32 %v36, 0.0
  %v41 = vmax.f32 %v37, 0.0
  %v42 = vmax.f32 %v38, 0.0
  %v43 = vmax.f32 %v39, 0.0
  %44 = vst [vmem:[%s3] sm:$0xff] %v40
  %45 = vst [vmem:[%s3 + $0x8] sm:$0xff] %v41
  %46 = vst [vmem:[%s3 + $0x10] sm:$0xff] %v42
  %47 = vst [vmem:[%s3 + $0x18] sm:$0xff] %v43
  // Predicated region
  $region14: #{upsample_conv_forward.5} parent=0 // pred_check
    _
  $region15: #{upsample_conv_forward.5} parent=0 // pred_check_branch
    %49 = sbr.rel (0) target = $region17
  $region16: #{upsample_conv_forward.5} parent=0 // pred_region
    _
  $region17: #{upsample_conv_forward.5} parent=0 // pred_fallthru
    _
  // Predicated region
  $region18: #{upsample_conv_forward.5} parent=0 // pred_check
    _
  $region19: #{upsample_conv_forward.5} parent=0 // pred_check_branch
    %51 = sbr.rel (0) target = $region21
  $region20: #{upsample_conv_forward.5} parent=0 // pred_region
    _
  $region21: #{upsample_conv_forward.5} parent=0 // pred_fallthru
    _

// kernel: upsample_conv_forward.4
$region0: #{upsample_conv_forward.4}
  #allocation0 [shape = 'u32[]', space=smem, size = 0x4, offset = 0x4, fixed_abs, tag = 'smem constant byte address 0x4 - core index']
  #allocation1 [shape = 'u32[144,128]{1,0:T(1,128)}', space=vmem, size = 0x12000, scoped, tag = 'internal scratch']
  #allocation2 [shape = 'bf16[2,18,128]{2,1,0:T(8,128)(2,1)}', space=vmem, size = 0x3000, scoped, tag = 'scratch operand']
  %s0 = inlined_call_operand.vmem [shape: f32[1,128], index: 0, kind: input, shape index: {}]
  %s1 = inlined_call_operand.vmem [shape: f32[1,128], index: 1, kind: input, shape index: {}]
  %s2 = inlined_call_operand.vmem [shape: bf16[2,16,128], index: 2, kind: input, shape index: {}]
  %s3 = inlined_call_operand.vmem [shape: bf16[3,128,128], index: 3, kind: input, shape index: {}]
  %s4 = inlined_call_operand.vmem [shape: f32[1,128], index: 4, kind: input, shape index: {}]
  %s5 = inlined_call_operand.vmem [shape: f32[2,16,128], index: 5, kind: output, shape index: {0}]
  %s6 = inlined_call_operand.vmem [shape: f32[1,2,128], index: 6, kind: output, shape index: {1}]
  %7 = xla_tuple %s5, %s6
  %s8 = sld [smem:[#allocation0]]
  $region38: #{upsample_conv_forward.4} parent=0
    _
  %s10 = ssub.s32 1, %s8
  %s11 = scalar_select 0, %s10, %s8
  // Predicated region
  $region2: #{upsample_conv_forward.4} parent=0 // pred_check
    _
  $region3: #{upsample_conv_forward.4} parent=0 // pred_check_branch
    %13 = sbr.rel (0) target = $region5
  $region4: #{upsample_conv_forward.4} parent=0 // pred_region
    _
  $region5: #{upsample_conv_forward.4} parent=0 // pred_fallthru
    _
  // Predicated region
  $region6: #{upsample_conv_forward.4} parent=0 // pred_check
    _
  $region7: #{upsample_conv_forward.4} parent=0 // pred_check_branch
    %15 = sbr.rel (0) target = $region9
  $region8: #{upsample_conv_forward.4} parent=0 // pred_region
    _
  $region9: #{upsample_conv_forward.4} parent=0 // pred_fallthru
    _
  // Predicated region
  $region10: #{upsample_conv_forward.4} parent=0 // pred_check
    _
  $region11: #{upsample_conv_forward.4} parent=0 // pred_check_branch
    %17 = sbr.rel (0) target = $region13
  $region12: #{upsample_conv_forward.4} parent=0 // pred_region
    _
  $region13: #{upsample_conv_forward.4} parent=0 // pred_fallthru
    _
  // Predicated region
  $region14: #{upsample_conv_forward.4} parent=0 // pred_check
    _
  $region15: #{upsample_conv_forward.4} parent=0 // pred_check_branch
    %19 = sbr.rel (0) target = $region17
  $region16: #{upsample_conv_forward.4} parent=0 // pred_region
    _
  $region17: #{upsample_conv_forward.4} parent=0 // pred_fallthru
    _
  // Predicated region
  $region18: #{upsample_conv_forward.4} parent=0 // pred_check
    _
  $region19: #{upsample_conv_forward.4} parent=0 // pred_check_branch
    %21 = sbr.rel (0) target = $region21
  $region20: #{upsample_conv_forward.4} parent=0 // pred_region
    _
  $region21: #{upsample_conv_forward.4} parent=0 // pred_fallthru
    _
  %v23 = vld [vmem:[%s2] sm:$0xf]
  %v24 = vld [vmem:[%s2 + $0x4] sm:$0xf]
  %v25 = vld [vmem:[%s2 + $0x8] sm:$0xf]
  %v26 = vld [vmem:[%s2 + $0xc] sm:$0xf]
  %v27 = vunpack.c.l.bf16 %v23
  %v28 = vunpack.c.l.bf16 %v24
  %v29 = vunpack.c.l.bf16 %v25
  %v30 = vunpack.c.l.bf16 %v26
  %v31 = vld [vmem:[%s0] sm:$0x1]
  %v33 = vlaneseq
  %v34 = vshrl.u32 %v33, 7
  %v35 = vsub.s32 0, %v34
  %v36 = vrot.slane %v31, %v35
  %v38 = vmul.f32 %v27, %v36
  %v39 = vmul.f32 %v28, %v36
  %v40 = vmul.f32 %v29, %v36
  %v41 = vmul.f32 %v30, %v36
  %v42 = vld [vmem:[%s1] sm:$0x1]
  %v44 = vlaneseq
  %v45 = vshrl.u32 %v44, 7
  %v46 = vsub.s32 0, %v45
  %v47 = vrot.slane %v42, %v46
  %v49 = vadd.f32 %v38, %v47
  %v50 = vadd.f32 %v39, %v47
  %v51 = vadd.f32 %v40, %v47
  %v52 = vadd.f32 %v41, %v47
  %v53 = vmax.f32 %v49, 0.0
  %v54 = vmax.f32 %v50, 0.0
  %v55 = vmax.f32 %v51, 0.0
  %v56 = vmax.f32 %v52, 0.0
  %vm57 = vcmask 1040384
  %vm58 = vsmask.f32 256
  %vm59 = vmand %vm57, %vm58
  %v60 = vld [vmem:[#allocation2] sm:$0x1]
  %v61 = vsel %vm59, 0, %v60
  %62 = vst [vmem:[#allocation2] sm:$0x1] %v61
  %v63 = vld [vmem:[#allocation2 + $0xc] sm:$0x1]
  %v64 = vsel %vm59, 0, %v63
  %65 = vst [vmem:[#allocation2 + $0xc] sm:$0x1] %v64
  %vm66 = vsmask.f32 7938
  %vm67 = vmand %vm57, %vm66
  %v68 = vld [vmem:[#allocation2 + $0x8] sm:$0x1]
  %v69 = vsel %vm67, 0, %v68
  %70 = vst [vmem:[#allocation2 + $0x8] sm:$0x1] %v69
  %v71 = vld [vmem:[#allocation2 + $0x14] sm:$0x1]
  %v72 = vsel %vm67, 0, %v71
  %73 = vst [vmem:[#allocation2 + $0x14] sm:$0x1] %v72
  %v74 = vpack.c.bf16 %v54, %v53
  %v75 = vpack.c.bf16 %v56, %v55
  %v78 = vunpack.c.l.b16 %v74
  %v79 = vunpack.c.h.b16 %v74
  %v80 = vunpack.c.l.b16 %v75
  %v81 = vunpack.c.h.b16 %v75
  %v82 = vpack.c.b16 %v78, %v78
  %v83 = vpack.c.b16 %v79, %v79
  %v84 = vpack.c.b16 %v80, %v80
  %v85 = vpack.c.b16 %v81, %v81
  %vm86 = vsmask.f32 4368
  %vm87 = vmor %vm58, %vm86
  %v89 = vshrl.u32 %v82, 16
  %v91 = vrot.slane %v89, 7
  %v92 = vshll.u32 %v82, 16
  %v94 = vor.u32 %v91, %v92
  %v95 = vrot.slane %v91, 4
  %v97 = vshrl.u32 %v83, 16
  %v99 = vrot.slane %v97, 7
  %v100 = vshll.u32 %v83, 16
  %v102 = vor.u32 %v99, %v100
  %v103 = vsel %vm87, %v95, %v102
  %v104 = vrot.slane %v99, 4
  %v106 = vshrl.u32 %v84, 16
  %v108 = vrot.slane %v106, 7
  %v109 = vshll.u32 %v84, 16
  %v111 = vor.u32 %v108, %v109
  %v112 = vrot.slane %v108, 4
  %v114 = vshrl.u32 %v85, 16
  %v116 = vrot.slane %v114, 7
  %v117 = vshll.u32 %v85, 16
  %v119 = vor.u32 %v116, %v117
  %v120 = vsel %vm87, %v112, %v119
  %v121 = vrot.slane %v116, 4
  %vm128 = vcmask 1043456
  %vm129 = vmand %vm128, %vm66
  %v130 = vld [vmem:[#allocation2] sm:$0xf]
  %v131 = vsel %vm129, %v94, %v130
  %132 = vst [vmem:[#allocation2] sm:$0xf] %v131
  %133 = vst [vmem:[#allocation2 + $0x4] sm:$0xf] %v103
  %v134 = vld [vmem:[#allocation2 + $0x8] sm:$0x1]
  %v135 = vsel %vm59, %v104, %v134
  %136 = vst [vmem:[#allocation2 + $0x8] sm:$0x1] %v135
  %v137 = vld [vmem:[#allocation2 + $0xc] sm:$0xf]
  %v138 = vsel %vm129, %v111, %v137
  %139 = vst [vmem:[#allocation2 + $0xc] sm:$0xf] %v138
  %140 = vst [vmem:[#allocation2 + $0x10] sm:$0xf] %v120
  %v141 = vld [vmem:[#allocation2 + $0x14] sm:$0x1]
  %v142 = vsel %vm59, %v121, %v141
  %143 = vst [vmem:[#allocation2 + $0x14] sm:$0x1] %v142
  %v144 = vld [vmem:[#allocation2] sm:$0xf]
  %v145 = vld [vmem:[#allocation2 + $0x4] sm:$0xf]
  %v146 = vld [vmem:[#allocation2 + $0xc] sm:$0xf]
  %v147 = vld [vmem:[#allocation2 + $0x10] sm:$0xf]
  %v148 = vld [vmem:[%s3] sm:$0xf]
  %v149 = vld [vmem:[%s3 + $0x4] sm:$0xf]
  %v150 = vld [vmem:[%s3 + $0x8] sm:$0xf]
  %v151 = vld [vmem:[%s3 + $0xc] sm:$0xf]
  %v152 = vld [vmem:[%s3 + $0x10] sm:$0xf]
  %v153 = vld [vmem:[%s3 + $0x14] sm:$0xf]
  %v154 = vld [vmem:[%s3 + $0x18] sm:$0xf]
  %v155 = vld [vmem:[%s3 + $0x1c] sm:$0xf]
  %v156 = vld [vmem:[%s3 + $0x20] sm:$0xf]
  %v157 = vld [vmem:[%s3 + $0x24] sm:$0xf]
  %v158 = vld [vmem:[%s3 + $0x28] sm:$0xf]
  %v159 = vld [vmem:[%s3 + $0x2c] sm:$0xf]
  %v160 = vld [vmem:[%s3 + $0x30] sm:$0xf]
  %v161 = vld [vmem:[%s3 + $0x34] sm:$0xf]
  %v162 = vld [vmem:[%s3 + $0x38] sm:$0xf]
  %v163 = vld [vmem:[%s3 + $0x3c] sm:$0xf]
  %v164 = vld [vmem:[#allocation2 + $0x8] sm:$0x1]
  %v165 = vld [vmem:[#allocation2 + $0x14] sm:$0x1]
  %vm166 = vsmask.f32 3328
  %vm167 = vsmask.f32 7440
  %vm168 = vmor %vm166, %vm167
  %v170 = vshrl.u32 %v144, 16
  %v172 = vrot.slane %v170, 4
  %v173 = vshll.u32 %v144, 16
  %v175 = vrot.slane %v173, 5
  %v176 = vor.u32 %v172, %v175
  %v177 = vrot.slane %v176, 4
  %v179 = vshll.u32 %v145, 16
  %v181 = vrot.slane %v179, 5
  %v182 = vsel %vm168, %v177, %v181
  %v183 = vshrl.u32 %v145, 16
  %v185 = vrot.slane %v183, 4
  %v186 = vor.u32 %v185, %v181
  %v187 = vrot.slane %v186, 4
  %v189 = vshll.u32 %v164, 16
  %v191 = vrot.slane %v189, 5
  %v192 = vsel %vm168, %v187, %v191
  %v194 = vshrl.u32 %v146, 16
  %v196 = vrot.slane %v194, 4
  %v197 = vshll.u32 %v146, 16
  %v199 = vrot.slane %v197, 5
  %v200 = vor.u32 %v196, %v199
  %v201 = vrot.slane %v200, 4
  %v203 = vshll.u32 %v147, 16
  %v205 = vrot.slane %v203, 5
  %v206 = vsel %vm168, %v201, %v205
  %v207 = vshrl.u32 %v147, 16
  %v209 = vrot.slane %v207, 4
  %v210 = vor.u32 %v209, %v205
  %v211 = vrot.slane %v210, 4
  %v213 = vshll.u32 %v165, 16
  %v215 = vrot.slane %v213, 5
  %v216 = vsel %vm168, %v211, %v215
  %s217 = scalar_lea.vmem %s3, 64
  %v218 = vld [vmem:[%s217] sm:$0xf]
  %v219 = vld [vmem:[%s217 + $0x4] sm:$0xf]
  %v220 = vld [vmem:[%s217 + $0x8] sm:$0xf]
  %v221 = vld [vmem:[%s217 + $0xc] sm:$0xf]
  %v222 = vld [vmem:[%s217 + $0x10] sm:$0xf]
  %v223 = vld [vmem:[%s217 + $0x14] sm:$0xf]
  %v224 = vld [vmem:[%s217 + $0x18] sm:$0xf]
  %v225 = vld [vmem:[%s217 + $0x1c] sm:$0xf]
  %v226 = vld [vmem:[%s217 + $0x20] sm:$0xf]
  %v227 = vld [vmem:[%s217 + $0x24] sm:$0xf]
  %v228 = vld [vmem:[%s217 + $0x28] sm:$0xf]
  %v229 = vld [vmem:[%s217 + $0x2c] sm:$0xf]
  %v230 = vld [vmem:[%s217 + $0x30] sm:$0xf]
  %v231 = vld [vmem:[%s217 + $0x34] sm:$0xf]
  %v232 = vld [vmem:[%s217 + $0x38] sm:$0xf]
  %v233 = vld [vmem:[%s217 + $0x3c] sm:$0xf]
  %v234 = vunpack.c.l.b16 %v182
  %v235 = vunpack.c.l.b16 %v192
  %v236 = vunpack.c.l.b16 %v206
  %v237 = vunpack.c.l.b16 %v216
  %v238 = vpack.c.b16 %v235, %v234
  %v239 = vpack.c.b16 %v237, %v236
  %v258 = vunpack.c.l.b16 %v218
  %v259 = vunpack.c.l.b16 %v219
  %v260 = vunpack.c.l.b16 %v220
  %v261 = vunpack.c.l.b16 %v221
  %v262 = vunpack.c.l.b16 %v222
  %v263 = vunpack.c.l.b16 %v223
  %v264 = vunpack.c.l.b16 %v224
  %v265 = vunpack.c.l.b16 %v225
  %v266 = vunpack.c.l.b16 %v226
  %v267 = vunpack.c.l.b16 %v227
  %v268 = vunpack.c.l.b16 %v228
  %v269 = vunpack.c.l.b16 %v229
  %v270 = vunpack.c.l.b16 %v230
  %v271 = vunpack.c.l.b16 %v231
  %v272 = vunpack.c.l.b16 %v232
  %v273 = vunpack.c.l.b16 %v233
  %v274 = vpack.c.b16 %v259, %v258
  %v275 = vpack.c.b16 %v261, %v260
  %v276 = vpack.c.b16 %v263, %v262
  %v277 = vpack.c.b16 %v265, %v264
  %v278 = vpack.c.b16 %v267, %v266
  %v279 = vpack.c.b16 %v269, %v268
  %v280 = vpack.c.b16 %v271, %v270
  %v281 = vpack.c.b16 %v273, %v272
  %290 = vmatprep.subr.bf16.mxu0 0
  %291 = vmatpush1.bf16.msra.mxu0 %v274
  %292 = vmatprep.subr.bf16.mxu0 0
  %293 = vmatpush1.bf16.msra.mxu0 %v275
  %294 = vmatprep.subr.bf16.mxu0 0
  %295 = vmatpush1.bf16.msra.mxu0 %v276
  %296 = vmatprep.subr.bf16.mxu0 0
  %297 = vmatpush1.bf16.msra.mxu0 %v277
  %298 = vmatprep.subr.bf16.mxu0 0
  %299 = vmatpush1.bf16.msra.mxu0 %v278
  %300 = vmatprep.subr.bf16.mxu0 0
  %301 = vmatpush1.bf16.msra.mxu0 %v279
  %302 = vmatprep.subr.bf16.mxu0 0
  %303 = vmatpush1.bf16.msra.mxu0 %v280
  %304 = vmatprep.subr.bf16.mxu0 0
  %305 = vmatpush1.bf16.msra.mxu0 %v281
  %306 = vmatprep.subr.bf16.mxu0 0
  %307 = vmatpush1.bf16.msra.mxu0 0
  %308 = vmatprep.subr.bf16.mxu0 0
  %309 = vmatpush1.bf16.msra.mxu0 0
  %310 = vmatprep.subr.bf16.mxu0 0
  %311 = vmatpush1.bf16.msra.mxu0 0
  %312 = vmatprep.subr.bf16.mxu0 0
  %313 = vmatpush1.bf16.msra.mxu0 0
  %314 = vmatprep.subr.bf16.mxu0 0
  %315 = vmatpush1.bf16.msra.mxu0 0
  %316 = vmatprep.subr.bf16.mxu0 0
  %317 = vmatpush1.bf16.msra.mxu0 0
  %318 = vmatprep.subr.bf16.mxu0 0
  %319 = vmatpush1.bf16.msra.mxu0 0
  %320 = vmatprep.subr.bf16.mxu0 0
  %321 = vmatpush1.bf16.msra.mxu0 0
  %322 = vmatprep.mubr.bf16.mxu0 0
  %323 = vmatmul.mubr.bf16.gmra.mrb[0].mxu0 %v238
  %v324 = vpop.f32.mrb[0].mxu0
  %v325 = vadd.f32 0.0, %v324
  %v326 = vpop.f32.mrb[0].mxu0
  %v327 = vpop.f32.mrb[0].mxu0
  %v328 = vadd.f32 0.0, %v327
  %v329 = vpop.f32.mrb[0].mxu0
  %330 = vmatprep.mubr.bf16.mxu0 0
  %331 = vmatmul.mubr.bf16.gmra.mrb[0].mxu0 %v239
  %v332 = vpop.f32.mrb[0].mxu0
  %v333 = vadd.f32 0.0, %v332
  %v334 = vpop.f32.mrb[0].mxu0
  %v335 = vpop.f32.mrb[0].mxu0
  %v336 = vadd.f32 0.0, %v335
  %v337 = vpop.f32.mrb[0].mxu0
  %338 = vdwg.mxu0
  %v343 = vunpack.c.l.b16 %v144
  %v344 = vunpack.c.l.b16 %v145
  %v345 = vunpack.c.l.b16 %v146
  %v346 = vunpack.c.l.b16 %v147
  %v347 = vpack.c.b16 %v344, %v343
  %v348 = vpack.c.b16 %v346, %v345
  %v367 = vunpack.c.l.b16 %v148
  %v368 = vunpack.c.l.b16 %v149
  %v369 = vunpack.c.l.b16 %v150
  %v370 = vunpack.c.l.b16 %v151
  %v371 = vunpack.c.l.b16 %v152
  %v372 = vunpack.c.l.b16 %v153
  %v373 = vunpack.c.l.b16 %v154
  %v374 = vunpack.c.l.b16 %v155
  %v375 = vunpack.c.l.b16 %v156
  %v376 = vunpack.c.l.b16 %v157
  %v377 = vunpack.c.l.b16 %v158
  %v378 = vunpack.c.l.b16 %v159
  %v379 = vunpack.c.l.b16 %v160
  %v380 = vunpack.c.l.b16 %v161
  %v381 = vunpack.c.l.b16 %v162
  %v382 = vunpack.c.l.b16 %v163
  %v383 = vpack.c.b16 %v368, %v367
  %v384 = vpack.c.b16 %v370, %v369
  %v385 = vpack.c.b16 %v372, %v371
  %v386 = vpack.c.b16 %v374, %v373
  %v387 = vpack.c.b16 %v376, %v375
  %v388 = vpack.c.b16 %v378, %v377
  %v389 = vpack.c.b16 %v380, %v379
  %v390 = vpack.c.b16 %v382, %v381
  %399 = vmatprep.subr.bf16.mxu0 0
  %400 = vmatpush1.bf16.msra.mxu0 %v383
  %401 = vmatprep.subr.bf16.mxu0 0
  %402 = vmatpush1.bf16.msra.mxu0 %v384
  %403 = vmatprep.subr.bf16.mxu0 0
  %404 = vmatpush1.bf16.msra.mxu0 %v385
  %405 = vmatprep.subr.bf16.mxu0 0
  %406 = vmatpush1.bf16.msra.mxu0 %v386
  %407 = vmatprep.subr.bf16.mxu0 0
  %408 = vmatpush1.bf16.msra.mxu0 %v387
  %409 = vmatprep.subr.bf16.mxu0 0
  %410 = vmatpush1.bf16.msra.mxu0 %v388
  %411 = vmatprep.subr.bf16.mxu0 0
  %412 = vmatpush1.bf16.msra.mxu0 %v389
  %413 = vmatprep.subr.bf16.mxu0 0
  %414 = vmatpush1.bf16.msra.mxu0 %v390
  %415 = vmatprep.subr.bf16.mxu0 0
  %416 = vmatpush1.bf16.msra.mxu0 0
  %417 = vmatprep.subr.bf16.mxu0 0
  %418 = vmatpush1.bf16.msra.mxu0 0
  %419 = vmatprep.subr.bf16.mxu0 0
  %420 = vmatpush1.bf16.msra.mxu0 0
  %421 = vmatprep.subr.bf16.mxu0 0
  %422 = vmatpush1.bf16.msra.mxu0 0
  %423 = vmatprep.subr.bf16.mxu0 0
  %424 = vmatpush1.bf16.msra.mxu0 0
  %425 = vmatprep.subr.bf16.mxu0 0
  %426 = vmatpush1.bf16.msra.mxu0 0
  %427 = vmatprep.subr.bf16.mxu0 0
  %428 = vmatpush1.bf16.msra.mxu0 0
  %429 = vmatprep.subr.bf16.mxu0 0
  %430 = vmatpush1.bf16.msra.mxu0 0
  %431 = vmatprep.mubr.bf16.mxu0 0
  %432 = vmatmul.mubr.bf16.gmra.mrb[0].mxu0 %v347
  %v433 = vpop.f32.mrb[0].mxu0
  %v434 = vadd.f32 %v325, %v433
  %v435 = vpop.f32.mrb[0].mxu0
  %v436 = vpop.f32.mrb[0].mxu0
  %v437 = vadd.f32 %v328, %v436
  %v438 = vpop.f32.mrb[0].mxu0
  %439 = vmatprep.mubr.bf16.mxu0 0
  %440 = vmatmul.mubr.bf16.gmra.mrb[0].mxu0 %v348
  %v441 = vpop.f32.mrb[0].mxu0
  %v442 = vadd.f32 %v333, %v441
  %v443 = vpop.f32.mrb[0].mxu0
  %v444 = vpop.f32.mrb[0].mxu0
  %v445 = vadd.f32 %v336, %v444
  %v446 = vpop.f32.mrb[0].mxu0
  %447 = vdwg.mxu0
  %v448 = vld [vmem:[#allocation2] sm:$0xe]
  %v449 = vld [vmem:[#allocation2 + $0xc] sm:$0xe]
  %vm454 = vcmask 1042432
  %vm455 = vcmask 1046532
  %vm456 = vmor %vm454, %vm455
  %v457 = vrot.slane %v448, 5
  %v458 = vrot.slane %v457, 4
  %v459 = vrot.slane %v145, 5
  %v460 = vsel %vm456, %v458, %v459
  %v461 = vrot.slane %v459, 4
  %v462 = vrot.slane %v164, 5
  %v463 = vsel %vm456, %v461, %v462
  %v464 = vrot.slane %v449, 5
  %v465 = vrot.slane %v464, 4
  %v466 = vrot.slane %v147, 5
  %v467 = vsel %vm456, %v465, %v466
  %v468 = vrot.slane %v466, 4
  %v469 = vrot.slane %v165, 5
  %v470 = vsel %vm456, %v468, %v469
  %s471 = scalar_lea.vmem %s3, 128
  %v472 = vld [vmem:[%s471] sm:$0xf]
  %v473 = vld [vmem:[%s471 + $0x4] sm:$0xf]
  %v474 = vld [vmem:[%s471 + $0x8] sm:$0xf]
  %v475 = vld [vmem:[%s471 + $0xc] sm:$0xf]
  %v476 = vld [vmem:[%s471 + $0x10] sm:$0xf]
  %v477 = vld [vmem:[%s471 + $0x14] sm:$0xf]
  %v478 = vld [vmem:[%s471 + $0x18] sm:$0xf]
  %v479 = vld [vmem:[%s471 + $0x1c] sm:$0xf]
  %v480 = vld [vmem:[%s471 + $0x20] sm:$0xf]
  %v481 = vld [vmem:[%s471 + $0x24] sm:$0xf]
  %v482 = vld [vmem:[%s471 + $0x28] sm:$0xf]
  %v483 = vld [vmem:[%s471 + $0x2c] sm:$0xf]
  %v484 = vld [vmem:[%s471 + $0x30] sm:$0xf]
  %v485 = vld [vmem:[%s471 + $0x34] sm:$0xf]
  %v486 = vld [vmem:[%s471 + $0x38] sm:$0xf]
  %v487 = vld [vmem:[%s471 + $0x3c] sm:$0xf]
  %v488 = vunpack.c.l.b16 %v460
  %v489 = vunpack.c.l.b16 %v463
  %v490 = vunpack.c.l.b16 %v467
  %v491 = vunpack.c.l.b16 %v470
  %v492 = vpack.c.b16 %v489, %v488
  %v493 = vpack.c.b16 %v491, %v490
  %v512 = vunpack.c.l.b16 %v472
  %v513 = vunpack.c.l.b16 %v473
  %v514 = vunpack.c.l.b16 %v474
  %v515 = vunpack.c.l.b16 %v475
  %v516 = vunpack.c.l.b16 %v476
  %v517 = vunpack.c.l.b16 %v477
  %v518 = vunpack.c.l.b16 %v478
  %v519 = vunpack.c.l.b16 %v479
  %v520 = vunpack.c.l.b16 %v480
  %v521 = vunpack.c.l.b16 %v481
  %v522 = vunpack.c.l.b16 %v482
  %v523 = vunpack.c.l.b16 %v483
  %v524 = vunpack.c.l.b16 %v484
  %v525 = vunpack.c.l.b16 %v485
  %v526 = vunpack.c.l.b16 %v486
  %v527 = vunpack.c.l.b16 %v487
  %v528 = vpack.c.b16 %v513, %v512
  %v529 = vpack.c.b16 %v515, %v514
  %v530 = vpack.c.b16 %v517, %v516
  %v531 = vpack.c.b16 %v519, %v518
  %v532 = vpack.c.b16 %v521, %v520
  %v533 = vpack.c.b16 %v523, %v522
  %v534 = vpack.c.b16 %v525, %v524
  %v535 = vpack.c.b16 %v527, %v526
  %544 = vmatprep.subr.bf16.mxu0 0
  %545 = vmatpush1.bf16.msra.mxu0 %v528
  %546 = vmatprep.subr.bf16.mxu0 0
  %547 = vmatpush1.bf16.msra.mxu0 %v529
  %548 = vmatprep.subr.bf16.mxu0 0
  %549 = vmatpush1.bf16.msra.mxu0 %v530
  %550 = vmatprep.subr.bf16.mxu0 0
  %551 = vmatpush1.bf16.msra.mxu0 %v531
  %552 = vmatprep.subr.bf16.mxu0 0
  %553 = vmatpush1.bf16.msra.mxu0 %v532
  %554 = vmatprep.subr.bf16.mxu0 0
  %555 = vmatpush1.bf16.msra.mxu0 %v533
  %556 = vmatprep.subr.bf16.mxu0 0
  %557 = vmatpush1.bf16.msra.mxu0 %v534
  %558 = vmatprep.subr.bf16.mxu0 0
  %559 = vmatpush1.bf16.msra.mxu0 %v535
  %560 = vmatprep.subr.bf16.mxu0 0
  %561 = vmatpush1.bf16.msra.mxu0 0
  %562 = vmatprep.subr.bf16.mxu0 0
  %563 = vmatpush1.bf16.msra.mxu0 0
  %564 = vmatprep.subr.bf16.mxu0 0
  %565 = vmatpush1.bf16.msra.mxu0 0
  %566 = vmatprep.subr.bf16.mxu0 0
  %567 = vmatpush1.bf16.msra.mxu0 0
  %568 = vmatprep.subr.bf16.mxu0 0
  %569 = vmatpush1.bf16.msra.mxu0 0
  %570 = vmatprep.subr.bf16.mxu0 0
  %571 = vmatpush1.bf16.msra.mxu0 0
  %572 = vmatprep.subr.bf16.mxu0 0
  %573 = vmatpush1.bf16.msra.mxu0 0
  %574 = vmatprep.subr.bf16.mxu0 0
  %575 = vmatpush1.bf16.msra.mxu0 0
  %576 = vmatprep.mubr.bf16.mxu0 0
  %577 = vmatmul.mubr.bf16.gmra.mrb[0].mxu0 %v492
  %v578 = vpop.f32.mrb[0].mxu0
  %v579 = vadd.f32 0.0, %v578
  %v580 = vpop.f32.mrb[0].mxu0
  %v581 = vpop.f32.mrb[0].mxu0
  %v582 = vadd.f32 0.0, %v581
  %v583 = vpop.f32.mrb[0].mxu0
  %584 = vmatprep.mubr.bf16.mxu0 0
  %585 = vmatmul.mubr.bf16.gmra.mrb[0].mxu0 %v493
  %v586 = vpop.f32.mrb[0].mxu0
  %v587 = vadd.f32 0.0, %v586
  %v588 = vpop.f32.mrb[0].mxu0
  %v589 = vpop.f32.mrb[0].mxu0
  %v590 = vadd.f32 0.0, %v589
  %v591 = vpop.f32.mrb[0].mxu0
  %592 = vdwg.mxu0
  %v593 = vadd.f32 %v434, %v579
  %v594 = vadd.f32 %v437, %v582
  %v595 = vadd.f32 %v442, %v587
  %v596 = vadd.f32 %v445, %v590
  %v597 = vadd.f32 %v593, %v594
  %v598 = vadd.f32 %v597, %v595
  %v599 = vadd.f32 %v598, %v596
  %v600 = vrot.slane %v599, 4
  %v601 = vadd.f32 %v599, %v600
  %v602 = vrot.slane %v601, 2
  %v603 = vadd.f32 %v601, %v602
  %v604 = vrot.slane %v603, 1
  %v605 = vadd.f32 %v603, %v604
  %606 = vst [vmem:[%s6] sm:$0x1] %v605
  %v607 = vmul.f32 %v593, %v593
  %v608 = vmul.f32 %v594, %v594
  %v609 = vmul.f32 %v595, %v595
  %v610 = vmul.f32 %v596, %v596
  %v611 = vadd.f32 %v607, %v608
  %v612 = vadd.f32 %v611, %v609
  %v613 = vadd.f32 %v612, %v610
  %v614 = vrot.slane %v613, 4
  %v615 = vadd.f32 %v613, %v614
  %v616 = vrot.slane %v615, 2
  %v617 = vadd.f32 %v615, %v616
  %v618 = vrot.slane %v617, 1
  %v619 = vadd.f32 %v617, %v618
  %620 = vst [vmem:[%s6 + $0x1] sm:$0x1] %v619
  %v621 = vld [vmem:[%s4] sm:$0x1]
  %v623 = vlaneseq
  %v624 = vshrl.u32 %v623, 7
  %v625 = vsub.s32 0, %v624
  %v626 = vrot.slane %v621, %v625
  %v628 = vadd.f32 %v593, %v626
  %v629 = vadd.f32 %v594, %v626
  %v630 = vadd.f32 %v595, %v626
  %v631 = vadd.f32 %v596, %v626
  %632 = vst [vmem:[%s5] sm:$0xff] %v628
  %633 = vst [vmem:[%s5 + $0x8] sm:$0xff] %v629
  %634 = vst [vmem:[%s5 + $0x10] sm:$0xff] %v630
  %635 = vst [vmem:[%s5 + $0x18] sm:$0xff] %v631
  // Predicated region
  $region22: #{upsample_conv_forward.4} parent=0 // pred_check
    _
  $region23: #{upsample_conv_forward.4} parent=0 // pred_check_branch
    %637 = sbr.rel (0) target = $region25
  $region24: #{upsample_conv_forward.4} parent=0 // pred_region
    _
  $region25: #{upsample_conv_forward.4} parent=0 // pred_fallthru
    _
  // Predicated region
  $region26: #{upsample_conv_forward.4} parent=0 // pred_check
    _
  $region27: #{upsample_conv_forward.4} parent=0 // pred_check_branch
    %639 = sbr.rel (0) target = $region29
  $region28: #{upsample_conv_forward.4} parent=0 // pred_region
    _
  $region29: #{upsample_conv_forward.4} parent=0 // pred_fallthru
    _
  // Predicated region
  $region30: #{upsample_conv_forward.4} parent=0 // pred_check
    _
  $region31: #{upsample_conv_forward.4} parent=0 // pred_check_branch
    %641 = sbr.rel (0) target = $region33
  $region32: #{upsample_conv_forward.4} parent=0 // pred_region
    _
  $region33: #{upsample_conv_forward.4} parent=0 // pred_fallthru
    _
  // Predicated region
  $region34: #{upsample_conv_forward.4} parent=0 // pred_check
    _
  $region35: #{upsample_conv_forward.4} parent=0 // pred_check_branch
    %643 = sbr.rel (0) target = $region37
  $region36: #{upsample_conv_forward.4} parent=0 // pred_region
    _
  $region37: #{upsample_conv_forward.4} parent=0 // pred_fallthru
    _

</llo_original>
